<compile_context>
chip_gen: v7x
topology: tpu7x:2x2x1
jax: 0.10.0
libtpu: 0.0.40
codegen_flags: <defaults>
</compile_context>

<pallas_src>
import math

import jax
import jax.numpy as jnp
from jax import lax
from jax.experimental import pallas as pl
from jax.experimental.pallas import tpu as pltpu

EPS = 1e-12


def _round_up(x, m):
    return (x + m - 1) // m * m


def dft_matrices(seq_len, f_pad):
    """Fused real DFT matrices for rfft/irfft along the seq axis, norm='ortho'.

    Returns:
      C: (2*f_pad, S)  -- rows [0,F) give Re(rfft), rows [f_pad, f_pad+F) give
                          Im(rfft); padded rows are zero.
      D: (S, 2*f_pad)  -- y = D @ concat([zr, zi], axis=0) implements irfft (ortho);
                          padded columns are zero.
    """
    F = seq_len // 2 + 1
    k = jnp.arange(F, dtype=jnp.float32)[:, None]
    n = jnp.arange(seq_len, dtype=jnp.float32)[None, :]
    theta = 2.0 * jnp.pi * k * n / seq_len
    scale = 1.0 / jnp.sqrt(jnp.float32(seq_len))
    cr = jnp.cos(theta) * scale                 # (F, S)   Re(rfft)
    ci = -jnp.sin(theta) * scale                # (F, S)   Im(rfft)
    a = jnp.full((F,), 2.0, jnp.float32).at[0].set(1.0)
    if seq_len % 2 == 0:
        a = a.at[F - 1].set(1.0)
    dr = (cr * a[:, None]).T                    # (S, F)   irfft from real part
    di = (ci * a[:, None]).T                    # (S, F)   irfft from imag part

    padF = lambda m: jnp.pad(m, ((0, f_pad - F), (0, 0)))
    C = jnp.concatenate([padF(cr), padF(ci)], axis=0)                        # (2Fp, S)
    D = jnp.concatenate([jnp.pad(dr, ((0, 0), (0, f_pad - F))),
                         jnp.pad(di, ((0, 0), (0, f_pad - F)))], axis=1)     # (S, 2Fp)
    return C, D


def _make_kernel(bt, f_pad):
    fp = f_pad

    def kernel(x_ref, c_ref, d_ref, wc_ref, pv_ref, w1_ref, bb1_ref, w2_ref, o_ref):
        x = x_ref[...].astype(jnp.float32)              # (Bt, S, H)
        cmat = c_ref[...]                               # (2Fp, S)   f32 or bf16
        dmat = d_ref[...]                               # (S, 2Fp)
        wc = wc_ref[...].astype(jnp.float32)            # (2Fp, H) = [wr; wi]
        wr, wi = wc[:fp], wc[fp:]

        # ---- FilterLayer: fused rfft -> complex filter -> fused irfft (per batch row)
        rows = []
        for b in range(bt):                             # static, small
            xb = x[b]                                                       # (S, H)
            xri = jnp.dot(cmat, xb.astype(cmat.dtype),
                          preferred_element_type=jnp.float32)               # (2Fp, H)
            xr, xi = xri[:fp], xri[fp:]
            zr = xr * wr - xi * wi
            zi = xr * wi + xi * wr
            zri = jnp.concatenate([zr, zi], axis=0)                         # (2Fp, H)
            yb = jnp.dot(dmat, zri.astype(dmat.dtype),
                         preferred_element_type=jnp.float32)                # (S, H)
            rows.append(yb + xb)                         # out_dropout == identity
        h = jnp.concatenate(rows, axis=0)                # (Bt*S, H)

        # packed per-channel params: rows = g1, b1, g2, b2, bb2 (all (1, H))
        pv = pv_ref[...]
        g1, b1, g2, b2, bb2 = pv[0:1], pv[1:2], pv[2:3], pv[3:4], pv[4:5]

        # ---- LayerNorm (FilterLayer) ------------------------------------------------
        u = jnp.mean(h, axis=-1, keepdims=True)
        d = h - u
        s = jnp.mean(d * d, axis=-1, keepdims=True)
        hn = g1 * (d * lax.rsqrt(s + EPS)) + b1          # (Bt*S, H)

        # ---- Intermediate: LayerNorm -> Linear/ReLU/Linear -> residual --------------
        u2 = jnp.mean(hn, axis=-1, keepdims=True)
        d2 = hn - u2
        s2 = jnp.mean(d2 * d2, axis=-1, keepdims=True)
        ln2 = g2 * (d2 * lax.rsqrt(s2 + EPS)) + b2       # dropout == identity

        w1 = w1_ref[...]
        t = jnp.dot(ln2.astype(w1.dtype), w1,
                    preferred_element_type=jnp.float32) + bb1_ref[...]      # (Bt*S, I)
        t = jnp.maximum(t, 0.0)
        w2 = w2_ref[...]
        mlp = jnp.dot(t.astype(w2.dtype), w2,
                      preferred_element_type=jnp.float32) + bb2             # (Bt*S, H)

        out = mlp + hn
        o_ref[...] = out.reshape(o_ref.shape).astype(o_ref.dtype)

    return kernel


def _pick_batch_tile(batch, seq_len, target_rows=256, max_rows=2048):
    """Largest divisor of `batch` giving >= target_rows rows (capped by max_rows)."""
    bt = 1
    for d in range(1, batch + 1):
        if batch % d == 0 and d * seq_len <= max_rows:
            bt = d
            if d * seq_len >= target_rows:
                break
    return bt


def layer_forward(x, params, matmul_dtype=jnp.float32):
    B, S, H = x.shape
    F = S // 2 + 1
    Fp = _round_up(F, 8)                     # sublane-aligned frequency dim
    I = params["w1"].shape[1]

    Bt = _pick_batch_tile(B, S)
    grid = (B // Bt,)

    C, D = dft_matrices(S, Fp)
    pad_w = lambda w: jnp.pad(w, ((0, Fp - F), (0, 0)))
    Wc = jnp.concatenate([pad_w(params["wr"]), pad_w(params["wi"])], axis=0)  # (2Fp, H)
    pvec = jnp.concatenate([params["g1"], params["b1"], params["g2"],
                            params["b2"], params["bb2"]], axis=0)             # (5, H)

    md = jnp.dtype(matmul_dtype)
    args = (x, C.astype(md), D.astype(md), Wc, pvec,
            params["w1"].astype(md), params["bb1"], params["w2"].astype(md))

    kernel = _make_kernel(Bt, Fp)
    x_spec = pl.BlockSpec((Bt, S, H), lambda b: (b, 0, 0))
    out_spec = pl.BlockSpec((Bt, S, H), lambda b: (b, 0, 0))
    # NOTE: for lane-dense stores, production H should be a multiple of 128
    # (H=32 in the small test config means partially-masked stores).

    def const_specs(single_buffer):
        specs = []
        for a in args[1:]:
            nd = a.ndim
            kw = {"pipeline_mode": pl.Buffered(1)} if single_buffer else {}
            specs.append(pl.BlockSpec(a.shape, lambda b, _nd=nd: (0,) * _nd, **kw))
        return specs

    # Rough VMEM budget: double-buffered activation blocks + weight operands + slack.
    nbytes = lambda a: a.size * jnp.dtype(a.dtype).itemsize
    est = (4 * Bt * S * H * 4                      # x/out blocks, double buffered
           + sum(2 * nbytes(a) for a in args[1:])  # weights (worst case: 2 buffers)
           + 4 * Bt * S * max(H, I) * 4)           # in-kernel temporaries
    vmem_limit = int(min(96 * 1024 * 1024, max(32 * 1024 * 1024, 2 * est)))

    last_err = None
    for single_buffer in (True, False):
        try:
            call = pl.pallas_call(
                kernel,
                out_shape=jax.ShapeDtypeStruct((B, S, H), jnp.float32),
                grid=grid,
                in_specs=[x_spec] + const_specs(single_buffer),
                out_specs=out_spec,
                compiler_params=pltpu.CompilerParams(
                    dimension_semantics=("parallel",),
                    vmem_limit_bytes=vmem_limit),
            )
            return call(*args)
        except Exception as e:  # pl.Buffered(1) hint unsupported -> default buffering
            last_err = e
    raise last_err


def make_layer_params(key, seq_len, hidden, intermediate):
    F = seq_len // 2 + 1
    k1, k2, k3, k4, k5 = jax.random.split(key, 5)
    # FilterLayer.complex_weight: randn(1, F, H, 2) * 0.02
    cw = 0.02 * jax.random.normal(k1, (F, hidden, 2), dtype=jnp.float32)
    # Linear layers: PyTorch default U(-1/sqrt(fan_in), 1/sqrt(fan_in))
    lim1 = 1.0 / math.sqrt(hidden)
    w1 = jax.random.uniform(k2, (hidden, intermediate), jnp.float32, -lim1, lim1)
    bb1 = jax.random.uniform(k3, (1, intermediate), jnp.float32, -lim1, lim1)
    lim2 = 1.0 / math.sqrt(intermediate)
    w2 = jax.random.uniform(k4, (intermediate, hidden), jnp.float32, -lim2, lim2)
    bb2 = jax.random.uniform(k5, (1, hidden), jnp.float32, -lim2, lim2)
    return dict(
        wr=cw[..., 0], wi=cw[..., 1],
        g1=jnp.ones((1, hidden), jnp.float32), b1=jnp.zeros((1, hidden), jnp.float32),
        w1=w1, bb1=bb1, w2=w2, bb2=bb2,
        g2=jnp.ones((1, hidden), jnp.float32), b2=jnp.zeros((1, hidden), jnp.float32),
    )


def layer_reference(x, params):
    """Pure-JAX reference mirroring the PyTorch forward (eval mode)."""
    w = params["wr"] + 1j * params["wi"]
    xf = jnp.fft.rfft(x, axis=1, norm="ortho")
    y = jnp.fft.irfft(xf * w[None], n=x.shape[1], axis=1, norm="ortho").astype(jnp.float32)
    h = y + x

    def ln(z, g, b):
        u = z.mean(-1, keepdims=True)
        s = ((z - u) ** 2).mean(-1, keepdims=True)
        return g * (z - u) / jnp.sqrt(s + EPS) + b

    hn = ln(h, params["g1"], params["b1"])
    z = ln(hn, params["g2"], params["b2"])
    t = jnp.maximum(z @ params["w1"] + params["bb1"], 0.0)
    return t @ params["w2"] + params["bb2"] + hn


if __name__ == "__main__":
    B, S, H, I = 2, 8, 32, 64   # batch, max_seq_length, hidden_size, intermediate_size
    key = jax.random.PRNGKey(0)
    kx, kp = jax.random.split(key)
    x = jax.random.normal(kx, (B, S, H), dtype=jnp.float32)
    params = make_layer_params(kp, S, H, I)

    ref = layer_reference(x, params)

    # f32 path (tight tolerance)
    out = jax.block_until_ready(layer_forward(x, params))
    assert out.shape == (B, S, H)
    assert jnp.allclose(out, ref, atol=1e-3, rtol=1e-3), \
        f"f32 max abs err {jnp.max(jnp.abs(out - ref))}"

    # bf16 matmul-operand path (MXU-native on v6e/v7x); f32 accumulation, looser tol.
    out_bf16 = jax.block_until_ready(
        layer_forward(x, params, matmul_dtype=jnp.bfloat16))
    assert jnp.allclose(out_bf16, ref, atol=1e-1, rtol=1e-1), \
        f"bf16 max abs err {jnp.max(jnp.abs(out_bf16 - ref))}"

    print("KERNEL_OK")
</pallas_src>

<mosaic_0001>
module attributes {stable_mosaic.version = 11 : i64} {
  func.func @kernel(%arg0: i32, %arg1: memref<2x8x32xf32, #tpu.memory_space<vmem>>, %arg2: memref<16x8xf32, #tpu.memory_space<vmem>>, %arg3: memref<8x16xf32, #tpu.memory_space<vmem>>, %arg4: memref<16x32xf32, #tpu.memory_space<vmem>>, %arg5: memref<5x32xf32, #tpu.memory_space<vmem>>, %arg6: memref<32x64xf32, #tpu.memory_space<vmem>>, %arg7: memref<1x64xf32, #tpu.memory_space<vmem>>, %arg8: memref<64x32xf32, #tpu.memory_space<vmem>>, %arg9: memref<2x8x32xf32, #tpu.memory_space<vmem>>) attributes {dimension_semantics = [#tpu.dimension_semantics<parallel>], iteration_bounds = array<i64: 1>, scalar_prefetch = 0 : i64, scratch_operands = 0 : i64, tpu.core_type = #tpu.core_type<tc>, window_params = [{transform_indices = @transform_0, window_bounds = array<i64: 2, 8, 32>}, {pipeline_mode = #tpu.pipeline_mode<synchronous>, transform_indices = @transform_1, window_bounds = array<i64: 16, 8>}, {pipeline_mode = #tpu.pipeline_mode<synchronous>, transform_indices = @transform_2, window_bounds = array<i64: 8, 16>}, {pipeline_mode = #tpu.pipeline_mode<synchronous>, transform_indices = @transform_3, window_bounds = array<i64: 16, 32>}, {pipeline_mode = #tpu.pipeline_mode<synchronous>, transform_indices = @transform_4, window_bounds = array<i64: 5, 32>}, {pipeline_mode = #tpu.pipeline_mode<synchronous>, transform_indices = @transform_5, window_bounds = array<i64: 32, 64>}, {pipeline_mode = #tpu.pipeline_mode<synchronous>, transform_indices = @transform_6, window_bounds = array<i64: 1, 64>}, {pipeline_mode = #tpu.pipeline_mode<synchronous>, transform_indices = @transform_7, window_bounds = array<i64: 64, 32>}, {transform_indices = @transform_8, window_bounds = array<i64: 2, 8, 32>}]} {
    %c0 = arith.constant 0 : index
    %c0_0 = arith.constant 0 : index
    %c0_1 = arith.constant 0 : index
    %0 = vector.load %arg1[%c0, %c0_0, %c0_1] : memref<2x8x32xf32, #tpu.memory_space<vmem>>, vector<2x8x32xf32>
    %c0_2 = arith.constant 0 : index
    %c0_3 = arith.constant 0 : index
    %1 = vector.load %arg2[%c0_2, %c0_3] : memref<16x8xf32, #tpu.memory_space<vmem>>, vector<16x8xf32>
    %c0_4 = arith.constant 0 : index
    %c0_5 = arith.constant 0 : index
    %2 = vector.load %arg3[%c0_4, %c0_5] : memref<8x16xf32, #tpu.memory_space<vmem>>, vector<8x16xf32>
    %c0_6 = arith.constant 0 : index
    %c0_7 = arith.constant 0 : index
    %3 = vector.load %arg4[%c0_6, %c0_7] : memref<16x32xf32, #tpu.memory_space<vmem>>, vector<16x32xf32>
    %4 = vector.extract_strided_slice %3 {offsets = [0, 0], sizes = [8, 32], strides = [1, 1]} : vector<16x32xf32> to vector<8x32xf32>
    %5 = vector.extract_strided_slice %3 {offsets = [8, 0], sizes = [8, 32], strides = [1, 1]} : vector<16x32xf32> to vector<8x32xf32>
    %6 = vector.extract_strided_slice %0 {offsets = [0, 0, 0], sizes = [1, 8, 32], strides = [1, 1, 1]} : vector<2x8x32xf32> to vector<1x8x32xf32>
    %7 = vector.shape_cast %6 : vector<1x8x32xf32> to vector<8x32xf32>
    %cst = arith.constant dense<0.000000e+00> : vector<16x32xf32>
    %8 = tpu.matmul %1, %7, %cst {dimension_numbers = #tpu.dot_dimension_numbers<[1], [0], [0], [1], [0, 0, 1, 1], [], []>} : vector<16x8xf32>, vector<8x32xf32>, vector<16x32xf32> -> vector<16x32xf32>
    %9 = vector.extract_strided_slice %8 {offsets = [0, 0], sizes = [8, 32], strides = [1, 1]} : vector<16x32xf32> to vector<8x32xf32>
    %10 = vector.extract_strided_slice %8 {offsets = [8, 0], sizes = [8, 32], strides = [1, 1]} : vector<16x32xf32> to vector<8x32xf32>
    %11 = arith.mulf %9, %4 : vector<8x32xf32>
    %12 = arith.mulf %10, %5 : vector<8x32xf32>
    %13 = arith.subf %11, %12 : vector<8x32xf32>
    %14 = arith.mulf %9, %5 : vector<8x32xf32>
    %15 = arith.mulf %10, %4 : vector<8x32xf32>
    %16 = arith.addf %14, %15 : vector<8x32xf32>
    %17 = tpu.concatenate %13, %16 in 0 : vector<8x32xf32>, vector<8x32xf32> -> vector<16x32xf32>
    %cst_8 = arith.constant dense<0.000000e+00> : vector<8x32xf32>
    %18 = tpu.matmul %2, %17, %cst_8 {dimension_numbers = #tpu.dot_dimension_numbers<[1], [0], [0], [1], [0, 0, 1, 1], [], []>} : vector<8x16xf32>, vector<16x32xf32>, vector<8x32xf32> -> vector<8x32xf32>
    %19 = arith.addf %18, %7 : vector<8x32xf32>
    %20 = vector.extract_strided_slice %0 {offsets = [1, 0, 0], sizes = [1, 8, 32], strides = [1, 1, 1]} : vector<2x8x32xf32> to vector<1x8x32xf32>
    %21 = vector.shape_cast %20 : vector<1x8x32xf32> to vector<8x32xf32>
    %cst_9 = arith.constant dense<0.000000e+00> : vector<16x32xf32>
    %22 = tpu.matmul %1, %21, %cst_9 {dimension_numbers = #tpu.dot_dimension_numbers<[1], [0], [0], [1], [0, 0, 1, 1], [], []>} : vector<16x8xf32>, vector<8x32xf32>, vector<16x32xf32> -> vector<16x32xf32>
    %23 = vector.extract_strided_slice %22 {offsets = [0, 0], sizes = [8, 32], strides = [1, 1]} : vector<16x32xf32> to vector<8x32xf32>
    %24 = vector.extract_strided_slice %22 {offsets = [8, 0], sizes = [8, 32], strides = [1, 1]} : vector<16x32xf32> to vector<8x32xf32>
    %25 = arith.mulf %23, %4 : vector<8x32xf32>
    %26 = arith.mulf %24, %5 : vector<8x32xf32>
    %27 = arith.subf %25, %26 : vector<8x32xf32>
    %28 = arith.mulf %23, %5 : vector<8x32xf32>
    %29 = arith.mulf %24, %4 : vector<8x32xf32>
    %30 = arith.addf %28, %29 : vector<8x32xf32>
    %31 = tpu.concatenate %27, %30 in 0 : vector<8x32xf32>, vector<8x32xf32> -> vector<16x32xf32>
    %cst_10 = arith.constant dense<0.000000e+00> : vector<8x32xf32>
    %32 = tpu.matmul %2, %31, %cst_10 {dimension_numbers = #tpu.dot_dimension_numbers<[1], [0], [0], [1], [0, 0, 1, 1], [], []>} : vector<8x16xf32>, vector<16x32xf32>, vector<8x32xf32> -> vector<8x32xf32>
    %33 = arith.addf %32, %21 : vector<8x32xf32>
    %34 = tpu.concatenate %19, %33 in 0 : vector<8x32xf32>, vector<8x32xf32> -> vector<16x32xf32>
    %c0_11 = arith.constant 0 : index
    %c0_12 = arith.constant 0 : index
    %35 = vector.load %arg5[%c0_11, %c0_12] : memref<5x32xf32, #tpu.memory_space<vmem>>, vector<5x32xf32>
    %36 = vector.extract_strided_slice %35 {offsets = [0, 0], sizes = [1, 32], strides = [1, 1]} : vector<5x32xf32> to vector<1x32xf32>
    %37 = vector.extract_strided_slice %35 {offsets = [1, 0], sizes = [1, 32], strides = [1, 1]} : vector<5x32xf32> to vector<1x32xf32>
    %38 = vector.extract_strided_slice %35 {offsets = [2, 0], sizes = [1, 32], strides = [1, 1]} : vector<5x32xf32> to vector<1x32xf32>
    %39 = vector.extract_strided_slice %35 {offsets = [3, 0], sizes = [1, 32], strides = [1, 1]} : vector<5x32xf32> to vector<1x32xf32>
    %40 = vector.extract_strided_slice %35 {offsets = [4, 0], sizes = [1, 32], strides = [1, 1]} : vector<5x32xf32> to vector<1x32xf32>
    %cst_13 = arith.constant dense<0.000000e+00> : vector<16xf32>
    %41 = vector.multi_reduction <add>, %34, %cst_13 [1] : vector<16x32xf32> to vector<16xf32>
    %42 = vector.shape_cast %41 : vector<16xf32> to vector<16x1xf32>
    %cst_14 = arith.constant 3.200000e+01 : f32
    %43 = vector.broadcast %cst_14 : f32 to vector<16x1xf32>
    %44 = arith.divf %42, %43 : vector<16x1xf32>
    %45 = vector.broadcast %44 : vector<16x1xf32> to vector<16x32xf32>
    %46 = arith.subf %34, %45 : vector<16x32xf32>
    %47 = arith.mulf %46, %46 : vector<16x32xf32>
    %cst_15 = arith.constant dense<0.000000e+00> : vector<16xf32>
    %48 = vector.multi_reduction <add>, %47, %cst_15 [1] : vector<16x32xf32> to vector<16xf32>
    %49 = vector.shape_cast %48 : vector<16xf32> to vector<16x1xf32>
    %cst_16 = arith.constant 3.200000e+01 : f32
    %50 = vector.broadcast %cst_16 : f32 to vector<16x1xf32>
    %51 = arith.divf %49, %50 : vector<16x1xf32>
    %cst_17 = arith.constant 9.99999996E-13 : f32
    %52 = vector.broadcast %cst_17 : f32 to vector<16x1xf32>
    %53 = arith.addf %51, %52 : vector<16x1xf32>
    %54 = math.rsqrt %53 : vector<16x1xf32>
    %55 = vector.broadcast %54 : vector<16x1xf32> to vector<16x32xf32>
    %56 = arith.mulf %46, %55 : vector<16x32xf32>
    %57 = vector.broadcast %36 : vector<1x32xf32> to vector<16x32xf32>
    %58 = arith.mulf %57, %56 : vector<16x32xf32>
    %59 = vector.broadcast %37 : vector<1x32xf32> to vector<16x32xf32>
    %60 = arith.addf %58, %59 : vector<16x32xf32>
    %cst_18 = arith.constant dense<0.000000e+00> : vector<16xf32>
    %61 = vector.multi_reduction <add>, %60, %cst_18 [1] : vector<16x32xf32> to vector<16xf32>
    %62 = vector.shape_cast %61 : vector<16xf32> to vector<16x1xf32>
    %cst_19 = arith.constant 3.200000e+01 : f32
    %63 = vector.broadcast %cst_19 : f32 to vector<16x1xf32>
    %64 = arith.divf %62, %63 : vector<16x1xf32>
    %65 = vector.broadcast %64 : vector<16x1xf32> to vector<16x32xf32>
    %66 = arith.subf %60, %65 : vector<16x32xf32>
    %67 = arith.mulf %66, %66 : vector<16x32xf32>
    %cst_20 = arith.constant dense<0.000000e+00> : vector<16xf32>
    %68 = vector.multi_reduction <add>, %67, %cst_20 [1] : vector<16x32xf32> to vector<16xf32>
    %69 = vector.shape_cast %68 : vector<16xf32> to vector<16x1xf32>
    %cst_21 = arith.constant 3.200000e+01 : f32
    %70 = vector.broadcast %cst_21 : f32 to vector<16x1xf32>
    %71 = arith.divf %69, %70 : vector<16x1xf32>
    %cst_22 = arith.constant 9.99999996E-13 : f32
    %72 = vector.broadcast %cst_22 : f32 to vector<16x1xf32>
    %73 = arith.addf %71, %72 : vector<16x1xf32>
    %74 = math.rsqrt %73 : vector<16x1xf32>
    %75 = vector.broadcast %74 : vector<16x1xf32> to vector<16x32xf32>
    %76 = arith.mulf %66, %75 : vector<16x32xf32>
    %77 = vector.broadcast %38 : vector<1x32xf32> to vector<16x32xf32>
    %78 = arith.mulf %77, %76 : vector<16x32xf32>
    %79 = vector.broadcast %39 : vector<1x32xf32> to vector<16x32xf32>
    %80 = arith.addf %78, %79 : vector<16x32xf32>
    %c0_23 = arith.constant 0 : index
    %c0_24 = arith.constant 0 : index
    %81 = vector.load %arg6[%c0_23, %c0_24] : memref<32x64xf32, #tpu.memory_space<vmem>>, vector<32x64xf32>
    %cst_25 = arith.constant dense<0.000000e+00> : vector<16x64xf32>
    %82 = tpu.matmul %80, %81, %cst_25 {dimension_numbers = #tpu.dot_dimension_numbers<[1], [0], [0], [1], [0, 0, 1, 1], [], []>} : vector<16x32xf32>, vector<32x64xf32>, vector<16x64xf32> -> vector<16x64xf32>
    %c0_26 = arith.constant 0 : index
    %c0_27 = arith.constant 0 : index
    %83 = vector.load %arg7[%c0_26, %c0_27] : memref<1x64xf32, #tpu.memory_space<vmem>>, vector<1x64xf32>
    %84 = vector.broadcast %83 : vector<1x64xf32> to vector<16x64xf32>
    %85 = arith.addf %82, %84 : vector<16x64xf32>
    %cst_28 = arith.constant 0.000000e+00 : f32
    %86 = vector.broadcast %cst_28 : f32 to vector<16x64xf32>
    %87 = arith.maximumf %85, %86 : vector<16x64xf32>
    %c0_29 = arith.constant 0 : index
    %c0_30 = arith.constant 0 : index
    %88 = vector.load %arg8[%c0_29, %c0_30] : memref<64x32xf32, #tpu.memory_space<vmem>>, vector<64x32xf32>
    %cst_31 = arith.constant dense<0.000000e+00> : vector<16x32xf32>
    %89 = tpu.matmul %87, %88, %cst_31 {dimension_numbers = #tpu.dot_dimension_numbers<[1], [0], [0], [1], [0, 0, 1, 1], [], []>} : vector<16x64xf32>, vector<64x32xf32>, vector<16x32xf32> -> vector<16x32xf32>
    %90 = vector.broadcast %40 : vector<1x32xf32> to vector<16x32xf32>
    %91 = arith.addf %89, %90 : vector<16x32xf32>
    %92 = arith.addf %91, %60 : vector<16x32xf32>
    %93 = vector.shape_cast %92 : vector<16x32xf32> to vector<2x8x32xf32>
    %c0_32 = arith.constant 0 : index
    %c0_33 = arith.constant 0 : index
    %c0_34 = arith.constant 0 : index
    %94 = vector.load %arg9[%c0_32, %c0_33, %c0_34] : memref<2x8x32xf32, #tpu.memory_space<vmem>>, vector<2x8x32xf32>
    tpu.vector_store %arg9[%c0_32, %c0_33, %c0_34], %93 {strides = array<i32>} : memref<2x8x32xf32, #tpu.memory_space<vmem>>, vector<2x8x32xf32>,
    return
  }
  func.func @transform_0(%arg0: i32) -> (i32, i32, i32) {
    %c0_i32 = arith.constant 0 : i32
    %c0_i32_0 = arith.constant 0 : i32
    %c0_i32_1 = arith.constant 0 : i32
    return %arg0, %c0_i32, %c0_i32_0 : i32, i32, i32
  }
  func.func @transform_1(%arg0: i32) -> (i32, i32) {
    %c0_i32 = arith.constant 0 : i32
    %c0_i32_0 = arith.constant 0 : i32
    %c0_i32_1 = arith.constant 0 : i32
    return %c0_i32, %c0_i32_0 : i32, i32
  }
  func.func @transform_2(%arg0: i32) -> (i32, i32) {
    %c0_i32 = arith.constant 0 : i32
    %c0_i32_0 = arith.constant 0 : i32
    %c0_i32_1 = arith.constant 0 : i32
    return %c0_i32, %c0_i32_0 : i32, i32
  }
  func.func @transform_3(%arg0: i32) -> (i32, i32) {
    %c0_i32 = arith.constant 0 : i32
    %c0_i32_0 = arith.constant 0 : i32
    %c0_i32_1 = arith.constant 0 : i32
    return %c0_i32, %c0_i32_0 : i32, i32
  }
  func.func @transform_4(%arg0: i32) -> (i32, i32) {
    %c0_i32 = arith.constant 0 : i32
    %c0_i32_0 = arith.constant 0 : i32
    %c0_i32_1 = arith.constant 0 : i32
    return %c0_i32, %c0_i32_0 : i32, i32
  }
  func.func @transform_5(%arg0: i32) -> (i32, i32) {
    %c0_i32 = arith.constant 0 : i32
    %c0_i32_0 = arith.constant 0 : i32
    %c0_i32_1 = arith.constant 0 : i32
    return %c0_i32, %c0_i32_0 : i32, i32
  }
  func.func @transform_6(%arg0: i32) -> (i32, i32) {
    %c0_i32 = arith.constant 0 : i32
    %c0_i32_0 = arith.constant 0 : i32
    %c0_i32_1 = arith.constant 0 : i32
    return %c0_i32, %c0_i32_0 : i32, i32
  }
  func.func @transform_7(%arg0: i32) -> (i32, i32) {
    %c0_i32 = arith.constant 0 : i32
    %c0_i32_0 = arith.constant 0 : i32
    %c0_i32_1 = arith.constant 0 : i32
    return %c0_i32, %c0_i32_0 : i32, i32
  }
  func.func @transform_8(%arg0: i32) -> (i32, i32, i32) {
    %c0_i32 = arith.constant 0 : i32
    %c0_i32_0 = arith.constant 0 : i32
    %c0_i32_1 = arith.constant 0 : i32
    return %arg0, %c0_i32, %c0_i32_0 : i32, i32, i32
  }
}

module attributes {stable_mosaic.version = 11 : i64} {
  func.func @kernel(%arg0: i32, %arg1: memref<2x8x32xf32, #tpu.memory_space<vmem>>, %arg2: memref<16x8xf32, #tpu.memory_space<vmem>>, %arg3: memref<8x16xf32, #tpu.memory_space<vmem>>, %arg4: memref<16x32xf32, #tpu.memory_space<vmem>>, %arg5: memref<5x32xf32, #tpu.memory_space<vmem>>, %arg6: memref<32x64xf32, #tpu.memory_space<vmem>>, %arg7: memref<1x64xf32, #tpu.memory_space<vmem>>, %arg8: memref<64x32xf32, #tpu.memory_space<vmem>>, %arg9: memref<2x8x32xf32, #tpu.memory_space<vmem>>) attributes {dimension_semantics = [#tpu.dimension_semantics<parallel>], iteration_bounds = array<i64: 1>, scalar_prefetch = 0 : i64, scratch_operands = 0 : i64, tpu.core_type = #tpu.core_type<tc>, window_params = [{transform_indices = @transform_0, window_bounds = array<i64: 2, 8, 32>}, {pipeline_mode = #tpu.pipeline_mode<synchronous>, transform_indices = @transform_1, window_bounds = array<i64: 16, 8>}, {pipeline_mode = #tpu.pipeline_mode<synchronous>, transform_indices = @transform_2, window_bounds = array<i64: 8, 16>}, {pipeline_mode = #tpu.pipeline_mode<synchronous>, transform_indices = @transform_3, window_bounds = array<i64: 16, 32>}, {pipeline_mode = #tpu.pipeline_mode<synchronous>, transform_indices = @transform_4, window_bounds = array<i64: 5, 32>}, {pipeline_mode = #tpu.pipeline_mode<synchronous>, transform_indices = @transform_5, window_bounds = array<i64: 32, 64>}, {pipeline_mode = #tpu.pipeline_mode<synchronous>, transform_indices = @transform_6, window_bounds = array<i64: 1, 64>}, {pipeline_mode = #tpu.pipeline_mode<synchronous>, transform_indices = @transform_7, window_bounds = array<i64: 64, 32>}, {transform_indices = @transform_8, window_bounds = array<i64: 2, 8, 32>}]} {
    %c0 = arith.constant 0 : index
    %c0_0 = arith.constant 0 : index
    %c0_1 = arith.constant 0 : index
    %0 = vector.load %arg1[%c0, %c0_0, %c0_1] : memref<2x8x32xf32, #tpu.memory_space<vmem>>, vector<2x8x32xf32>
    %c0_2 = arith.constant 0 : index
    %c0_3 = arith.constant 0 : index
    %1 = vector.load %arg2[%c0_2, %c0_3] : memref<16x8xf32, #tpu.memory_space<vmem>>, vector<16x8xf32>
    %c0_4 = arith.constant 0 : index
    %c0_5 = arith.constant 0 : index
    %2 = vector.load %arg3[%c0_4, %c0_5] : memref<8x16xf32, #tpu.memory_space<vmem>>, vector<8x16xf32>
    %c0_6 = arith.constant 0 : index
    %c0_7 = arith.constant 0 : index
    %3 = vector.load %arg4[%c0_6, %c0_7] : memref<16x32xf32, #tpu.memory_space<vmem>>, vector<16x32xf32>
    %4 = vector.extract_strided_slice %3 {offsets = [0, 0], sizes = [8, 32], strides = [1, 1]} : vector<16x32xf32> to vector<8x32xf32>
    %5 = vector.extract_strided_slice %3 {offsets = [8, 0], sizes = [8, 32], strides = [1, 1]} : vector<16x32xf32> to vector<8x32xf32>
    %6 = vector.extract_strided_slice %0 {offsets = [0, 0, 0], sizes = [1, 8, 32], strides = [1, 1, 1]} : vector<2x8x32xf32> to vector<1x8x32xf32>
    %7 = vector.shape_cast %6 : vector<1x8x32xf32> to vector<8x32xf32>
    %cst = arith.constant dense<0.000000e+00> : vector<16x32xf32>
    %8 = tpu.matmul %1, %7, %cst {dimension_numbers = #tpu.dot_dimension_numbers<[1], [0], [0], [1], [0, 0, 1, 1], [], []>} : vector<16x8xf32>, vector<8x32xf32>, vector<16x32xf32> -> vector<16x32xf32>
    %9 = vector.extract_strided_slice %8 {offsets = [0, 0], sizes = [8, 32], strides = [1, 1]} : vector<16x32xf32> to vector<8x32xf32>
    %10 = vector.extract_strided_slice %8 {offsets = [8, 0], sizes = [8, 32], strides = [1, 1]} : vector<16x32xf32> to vector<8x32xf32>
    %11 = arith.mulf %9, %4 : vector<8x32xf32>
    %12 = arith.mulf %10, %5 : vector<8x32xf32>
    %13 = arith.subf %11, %12 : vector<8x32xf32>
    %14 = arith.mulf %9, %5 : vector<8x32xf32>
    %15 = arith.mulf %10, %4 : vector<8x32xf32>
    %16 = arith.addf %14, %15 : vector<8x32xf32>
    %17 = tpu.concatenate %13, %16 in 0 : vector<8x32xf32>, vector<8x32xf32> -> vector<16x32xf32>
    %cst_8 = arith.constant dense<0.000000e+00> : vector<8x32xf32>
    %18 = tpu.matmul %2, %17, %cst_8 {dimension_numbers = #tpu.dot_dimension_numbers<[1], [0], [0], [1], [0, 0, 1, 1], [], []>} : vector<8x16xf32>, vector<16x32xf32>, vector<8x32xf32> -> vector<8x32xf32>
    %19 = arith.addf %18, %7 : vector<8x32xf32>
    %20 = vector.extract_strided_slice %0 {offsets = [1, 0, 0], sizes = [1, 8, 32], strides = [1, 1, 1]} : vector<2x8x32xf32> to vector<1x8x32xf32>
    %21 = vector.shape_cast %20 : vector<1x8x32xf32> to vector<8x32xf32>
    %cst_9 = arith.constant dense<0.000000e+00> : vector<16x32xf32>
    %22 = tpu.matmul %1, %21, %cst_9 {dimension_numbers = #tpu.dot_dimension_numbers<[1], [0], [0], [1], [0, 0, 1, 1], [], []>} : vector<16x8xf32>, vector<8x32xf32>, vector<16x32xf32> -> vector<16x32xf32>
    %23 = vector.extract_strided_slice %22 {offsets = [0, 0], sizes = [8, 32], strides = [1, 1]} : vector<16x32xf32> to vector<8x32xf32>
    %24 = vector.extract_strided_slice %22 {offsets = [8, 0], sizes = [8, 32], strides = [1, 1]} : vector<16x32xf32> to vector<8x32xf32>
    %25 = arith.mulf %23, %4 : vector<8x32xf32>
    %26 = arith.mulf %24, %5 : vector<8x32xf32>
    %27 = arith.subf %25, %26 : vector<8x32xf32>
    %28 = arith.mulf %23, %5 : vector<8x32xf32>
    %29 = arith.mulf %24, %4 : vector<8x32xf32>
    %30 = arith.addf %28, %29 : vector<8x32xf32>
    %31 = tpu.concatenate %27, %30 in 0 : vector<8x32xf32>, vector<8x32xf32> -> vector<16x32xf32>
    %cst_10 = arith.constant dense<0.000000e+00> : vector<8x32xf32>
    %32 = tpu.matmul %2, %31, %cst_10 {dimension_numbers = #tpu.dot_dimension_numbers<[1], [0], [0], [1], [0, 0, 1, 1], [], []>} : vector<8x16xf32>, vector<16x32xf32>, vector<8x32xf32> -> vector<8x32xf32>
    %33 = arith.addf %32, %21 : vector<8x32xf32>
    %34 = tpu.concatenate %19, %33 in 0 : vector<8x32xf32>, vector<8x32xf32> -> vector<16x32xf32>
    %c0_11 = arith.constant 0 : index
    %c0_12 = arith.constant 0 : index
    %35 = vector.load %arg5[%c0_11, %c0_12] : memref<5x32xf32, #tpu.memory_space<vmem>>, vector<5x32xf32>
    %36 = vector.extract_strided_slice %35 {offsets = [0, 0], sizes = [1, 32], strides = [1, 1]} : vector<5x32xf32> to vector<1x32xf32>
    %37 = vector.extract_strided_slice %35 {offsets = [1, 0], sizes = [1, 32], strides = [1, 1]} : vector<5x32xf32> to vector<1x32xf32>
    %38 = vector.extract_strided_slice %35 {offsets = [2, 0], sizes = [1, 32], strides = [1, 1]} : vector<5x32xf32> to vector<1x32xf32>
    %39 = vector.extract_strided_slice %35 {offsets = [3, 0], sizes = [1, 32], strides = [1, 1]} : vector<5x32xf32> to vector<1x32xf32>
    %40 = vector.extract_strided_slice %35 {offsets = [4, 0], sizes = [1, 32], strides = [1, 1]} : vector<5x32xf32> to vector<1x32xf32>
    %cst_13 = arith.constant dense<0.000000e+00> : vector<16xf32>
    %41 = vector.multi_reduction <add>, %34, %cst_13 [1] : vector<16x32xf32> to vector<16xf32>
    %42 = vector.shape_cast %41 : vector<16xf32> to vector<16x1xf32>
    %cst_14 = arith.constant 3.200000e+01 : f32
    %43 = vector.broadcast %cst_14 : f32 to vector<16x1xf32>
    %44 = arith.divf %42, %43 : vector<16x1xf32>
    %45 = vector.broadcast %44 : vector<16x1xf32> to vector<16x32xf32>
    %46 = arith.subf %34, %45 : vector<16x32xf32>
    %47 = arith.mulf %46, %46 : vector<16x32xf32>
    %cst_15 = arith.constant dense<0.000000e+00> : vector<16xf32>
    %48 = vector.multi_reduction <add>, %47, %cst_15 [1] : vector<16x32xf32> to vector<16xf32>
    %49 = vector.shape_cast %48 : vector<16xf32> to vector<16x1xf32>
    %cst_16 = arith.constant 3.200000e+01 : f32
    %50 = vector.broadcast %cst_16 : f32 to vector<16x1xf32>
    %51 = arith.divf %49, %50 : vector<16x1xf32>
    %cst_17 = arith.constant 9.99999996E-13 : f32
    %52 = vector.broadcast %cst_17 : f32 to vector<16x1xf32>
    %53 = arith.addf %51, %52 : vector<16x1xf32>
    %54 = math.rsqrt %53 : vector<16x1xf32>
    %55 = vector.broadcast %54 : vector<16x1xf32> to vector<16x32xf32>
    %56 = arith.mulf %46, %55 : vector<16x32xf32>
    %57 = vector.broadcast %36 : vector<1x32xf32> to vector<16x32xf32>
    %58 = arith.mulf %57, %56 : vector<16x32xf32>
    %59 = vector.broadcast %37 : vector<1x32xf32> to vector<16x32xf32>
    %60 = arith.addf %58, %59 : vector<16x32xf32>
    %cst_18 = arith.constant dense<0.000000e+00> : vector<16xf32>
    %61 = vector.multi_reduction <add>, %60, %cst_18 [1] : vector<16x32xf32> to vector<16xf32>
    %62 = vector.shape_cast %61 : vector<16xf32> to vector<16x1xf32>
    %cst_19 = arith.constant 3.200000e+01 : f32
    %63 = vector.broadcast %cst_19 : f32 to vector<16x1xf32>
    %64 = arith.divf %62, %63 : vector<16x1xf32>
    %65 = vector.broadcast %64 : vector<16x1xf32> to vector<16x32xf32>
    %66 = arith.subf %60, %65 : vector<16x32xf32>
    %67 = arith.mulf %66, %66 : vector<16x32xf32>
    %cst_20 = arith.constant dense<0.000000e+00> : vector<16xf32>
    %68 = vector.multi_reduction <add>, %67, %cst_20 [1] : vector<16x32xf32> to vector<16xf32>
    %69 = vector.shape_cast %68 : vector<16xf32> to vector<16x1xf32>
    %cst_21 = arith.constant 3.200000e+01 : f32
    %70 = vector.broadcast %cst_21 : f32 to vector<16x1xf32>
    %71 = arith.divf %69, %70 : vector<16x1xf32>
    %cst_22 = arith.constant 9.99999996E-13 : f32
    %72 = vector.broadcast %cst_22 : f32 to vector<16x1xf32>
    %73 = arith.addf %71, %72 : vector<16x1xf32>
    %74 = math.rsqrt %73 : vector<16x1xf32>
    %75 = vector.broadcast %74 : vector<16x1xf32> to vector<16x32xf32>
    %76 = arith.mulf %66, %75 : vector<16x32xf32>
    %77 = vector.broadcast %38 : vector<1x32xf32> to vector<16x32xf32>
    %78 = arith.mulf %77, %76 : vector<16x32xf32>
    %79 = vector.broadcast %39 : vector<1x32xf32> to vector<16x32xf32>
    %80 = arith.addf %78, %79 : vector<16x32xf32>
    %c0_23 = arith.constant 0 : index
    %c0_24 = arith.constant 0 : index
    %81 = vector.load %arg6[%c0_23, %c0_24] : memref<32x64xf32, #tpu.memory_space<vmem>>, vector<32x64xf32>
    %cst_25 = arith.constant dense<0.000000e+00> : vector<16x64xf32>
    %82 = tpu.matmul %80, %81, %cst_25 {dimension_numbers = #tpu.dot_dimension_numbers<[1], [0], [0], [1], [0, 0, 1, 1], [], []>} : vector<16x32xf32>, vector<32x64xf32>, vector<16x64xf32> -> vector<16x64xf32>
    %c0_26 = arith.constant 0 : index
    %c0_27 = arith.constant 0 : index
    %83 = vector.load %arg7[%c0_26, %c0_27] : memref<1x64xf32, #tpu.memory_space<vmem>>, vector<1x64xf32>
    %84 = vector.broadcast %83 : vector<1x64xf32> to vector<16x64xf32>
    %85 = arith.addf %82, %84 : vector<16x64xf32>
    %cst_28 = arith.constant 0.000000e+00 : f32
    %86 = vector.broadcast %cst_28 : f32 to vector<16x64xf32>
    %87 = arith.maximumf %85, %86 : vector<16x64xf32>
    %c0_29 = arith.constant 0 : index
    %c0_30 = arith.constant 0 : index
    %88 = vector.load %arg8[%c0_29, %c0_30] : memref<64x32xf32, #tpu.memory_space<vmem>>, vector<64x32xf32>
    %cst_31 = arith.constant dense<0.000000e+00> : vector<16x32xf32>
    %89 = tpu.matmul %87, %88, %cst_31 {dimension_numbers = #tpu.dot_dimension_numbers<[1], [0], [0], [1], [0, 0, 1, 1], [], []>} : vector<16x64xf32>, vector<64x32xf32>, vector<16x32xf32> -> vector<16x32xf32>
    %90 = vector.broadcast %40 : vector<1x32xf32> to vector<16x32xf32>
    %91 = arith.addf %89, %90 : vector<16x32xf32>
    %92 = arith.addf %91, %60 : vector<16x32xf32>
    %93 = vector.shape_cast %92 : vector<16x32xf32> to vector<2x8x32xf32>
    %c0_32 = arith.constant 0 : index
    %c0_33 = arith.constant 0 : index
    %c0_34 = arith.constant 0 : index
    %94 = vector.load %arg9[%c0_32, %c0_33, %c0_34] : memref<2x8x32xf32, #tpu.memory_space<vmem>>, vector<2x8x32xf32>
    tpu.vector_store %arg9[%c0_32, %c0_33, %c0_34], %93 {strides = array<i32>} : memref<2x8x32xf32, #tpu.memory_space<vmem>>, vector<2x8x32xf32>,
    return
  }
  func.func @transform_0(%arg0: i32) -> (i32, i32, i32) {
    %c0_i32 = arith.constant 0 : i32
    %c0_i32_0 = arith.constant 0 : i32
    %c0_i32_1 = arith.constant 0 : i32
    return %arg0, %c0_i32, %c0_i32_0 : i32, i32, i32
  }
  func.func @transform_1(%arg0: i32) -> (i32, i32) {
    %c0_i32 = arith.constant 0 : i32
    %c0_i32_0 = arith.constant 0 : i32
    %c0_i32_1 = arith.constant 0 : i32
    return %c0_i32, %c0_i32_0 : i32, i32
  }
  func.func @transform_2(%arg0: i32) -> (i32, i32) {
    %c0_i32 = arith.constant 0 : i32
    %c0_i32_0 = arith.constant 0 : i32
    %c0_i32_1 = arith.constant 0 : i32
    return %c0_i32, %c0_i32_0 : i32, i32
  }
  func.func @transform_3(%arg0: i32) -> (i32, i32) {
    %c0_i32 = arith.constant 0 : i32
    %c0_i32_0 = arith.constant 0 : i32
    %c0_i32_1 = arith.constant 0 : i32
    return %c0_i32, %c0_i32_0 : i32, i32
  }
  func.func @transform_4(%arg0: i32) -> (i32, i32) {
    %c0_i32 = arith.constant 0 : i32
    %c0_i32_0 = arith.constant 0 : i32
    %c0_i32_1 = arith.constant 0 : i32
    return %c0_i32, %c0_i32_0 : i32, i32
  }
  func.func @transform_5(%arg0: i32) -> (i32, i32) {
    %c0_i32 = arith.constant 0 : i32
    %c0_i32_0 = arith.constant 0 : i32
    %c0_i32_1 = arith.constant 0 : i32
    return %c0_i32, %c0_i32_0 : i32, i32
  }
  func.func @transform_6(%arg0: i32) -> (i32, i32) {
    %c0_i32 = arith.constant 0 : i32
    %c0_i32_0 = arith.constant 0 : i32
    %c0_i32_1 = arith.constant 0 : i32
    return %c0_i32, %c0_i32_0 : i32, i32
  }
  func.func @transform_7(%arg0: i32) -> (i32, i32) {
    %c0_i32 = arith.constant 0 : i32
    %c0_i32_0 = arith.constant 0 : i32
    %c0_i32_1 = arith.constant 0 : i32
    return %c0_i32, %c0_i32_0 : i32, i32
  }
  func.func @transform_8(%arg0: i32) -> (i32, i32, i32) {
    %c0_i32 = arith.constant 0 : i32
    %c0_i32_0 = arith.constant 0 : i32
    %c0_i32_1 = arith.constant 0 : i32
    return %arg0, %c0_i32, %c0_i32_0 : i32, i32, i32
  }
}

</mosaic_0001>

<llo_original>
// kernel: tpu_custom_call.1
$region0: #{tpu_custom_call.1}
  #allocation0 [shape = 'u32[]', space=smem, size = 0x4, offset = 0x4, fixed_abs, tag = 'smem constant byte address 0x4 - core index']
  #allocation1 [shape = 'u32[144,128]{1,0:T(1,128)}', space=vmem, size = 0x12000, scoped, tag = 'internal scratch']
  %s0 = inlined_call_operand.vmem [shape: f32[2,8,32], index: 0, kind: input, shape index: {}]
  %s1 = inlined_call_operand.vmem [shape: f32[16,8], index: 1, kind: input, shape index: {}]
  %s2 = inlined_call_operand.vmem [shape: f32[8,16], index: 2, kind: input, shape index: {}]
  %s3 = inlined_call_operand.vmem [shape: f32[16,32], index: 3, kind: input, shape index: {}]
  %s4 = inlined_call_operand.vmem [shape: f32[5,32], index: 4, kind: input, shape index: {}]
  %s5 = inlined_call_operand.vmem [shape: f32[32,64], index: 5, kind: input, shape index: {}]
  %s6 = inlined_call_operand.vmem [shape: f32[1,64], index: 6, kind: input, shape index: {}]
  %s7 = inlined_call_operand.vmem [shape: f32[64,32], index: 7, kind: input, shape index: {}]
  %s8 = inlined_call_operand.hbm [shape: f32[2,8,32], index: 8, kind: output, shape index: {}]
  %s9 = sld [smem:[#allocation0]]
  $region42: #{tpu_custom_call.1} parent=0
    _
  %s11 = ssub.s32 1, %s9
  %s12 = scalar_select 0, %s11, %s9
  $region1: #{tpu_custom_call.1} parent=0
    #allocation2 [shape = 'u8[8192]{0}', space=vmem, size = 0x2000, scoped, tag = 'output window, operand 0, single buffered']
    #allocation3 [shape = 's32[1]{0}', space=sflag, size = 0x4, scoped, tag = 'scoped memory for tpu_custom_call.1']
    %13 = vsyncpa [#allocation3], 0
    // Predicated region
    $region2: #{tpu_custom_call.1} parent=1 // pred_check
      _
    $region3: #{tpu_custom_call.1} parent=1 // pred_check_branch
      %15 = sbr.rel (0) target = $region5
    $region4: #{tpu_custom_call.1} parent=1 // pred_region
      _
    $region5: #{tpu_custom_call.1} parent=1 // pred_fallthru
      _
    // Predicated region
    $region6: #{tpu_custom_call.1} parent=1 // pred_check
      _
    $region7: #{tpu_custom_call.1} parent=1 // pred_check_branch
      %17 = sbr.rel (0) target = $region9
    $region8: #{tpu_custom_call.1} parent=1 // pred_region
      _
    $region9: #{tpu_custom_call.1} parent=1 // pred_fallthru
      _
    // Predicated region
    $region10: #{tpu_custom_call.1} parent=1 // pred_check
      _
    $region11: #{tpu_custom_call.1} parent=1 // pred_check_branch
      %19 = sbr.rel (0) target = $region13
    $region12: #{tpu_custom_call.1} parent=1 // pred_region
      _
    $region13: #{tpu_custom_call.1} parent=1 // pred_fallthru
      _
    // Predicated region
    $region14: #{tpu_custom_call.1} parent=1 // pred_check
      _
    $region15: #{tpu_custom_call.1} parent=1 // pred_check_branch
      %21 = sbr.rel (0) target = $region17
    $region16: #{tpu_custom_call.1} parent=1 // pred_region
      _
    $region17: #{tpu_custom_call.1} parent=1 // pred_fallthru
      _
    // Predicated region
    $region18: #{tpu_custom_call.1} parent=1 // pred_check
      _
    $region19: #{tpu_custom_call.1} parent=1 // pred_check_branch
      %23 = sbr.rel (0) target = $region21
    $region20: #{tpu_custom_call.1} parent=1 // pred_region
      _
    $region21: #{tpu_custom_call.1} parent=1 // pred_fallthru
      _
    // Predicated region
    $region22: #{tpu_custom_call.1} parent=1 // pred_check
      _
    $region23: #{tpu_custom_call.1} parent=1 // pred_check_branch
      %25 = sbr.rel (0) target = $region25
    $region24: #{tpu_custom_call.1} parent=1 // pred_region
      _
    $region25: #{tpu_custom_call.1} parent=1 // pred_fallthru
      _
    // Predicated region
    $region26: #{tpu_custom_call.1} parent=1 // pred_check
      _
    $region27: #{tpu_custom_call.1} parent=1 // pred_check_branch
      %27 = sbr.rel (0) target = $region29
    $region28: #{tpu_custom_call.1} parent=1 // pred_region
      _
    $region29: #{tpu_custom_call.1} parent=1 // pred_fallthru
      _
    // Predicated region
    $region30: #{tpu_custom_call.1} parent=1 // pred_check
      _
    $region31: #{tpu_custom_call.1} parent=1 // pred_check_branch
      %29 = sbr.rel (0) target = $region33
    $region32: #{tpu_custom_call.1} parent=1 // pred_region
      _
    $region33: #{tpu_custom_call.1} parent=1 // pred_fallthru
      _
    %v30 = vld [vmem:[%s0] sm:$0xff]
    %v31 = vld [vmem:[%s0 + $0x8] sm:$0xff]
    %v32 = vld [vmem:[%s1] sm:$0xff]
    %v33 = vld [vmem:[%s1 + $0x8] sm:$0xff]
    %v34 = vld [vmem:[%s2] sm:$0xff]
    %v35 = vld [vmem:[%s3] sm:$0xff]
    %v36 = vld [vmem:[%s3 + $0x8] sm:$0xff]
    %vm37 = vcmask 64512
    %v39 = vsel %vm37, %v32, 0
    %v42 = vsel %vm37, %v33, 0
    %44 = vmatprep.subr.mxu0 0.0
    %45 = vmatpush1.msra.mxu0 %v30
    %46 = vmatprep.subr.mxu0 0.0
    %47 = vmatpush1.msra.mxu0 0.0
    %48 = vmatprep.subr.mxu0 0.0
    %49 = vmatpush1.msra.mxu0 0.0
    %50 = vmatprep.subr.mxu0 0.0
    %51 = vmatpush1.msra.mxu0 0.0
    %52 = vmatprep.subr.mxu0 0.0
    %53 = vmatpush1.msra.mxu0 0.0
    %54 = vmatprep.subr.mxu0 0.0
    %55 = vmatpush1.msra.mxu0 0.0
    %56 = vmatprep.subr.mxu0 0.0
    %57 = vmatpush1.msra.mxu0 0.0
    %58 = vmatprep.subr.mxu0 0.0
    %59 = vmatpush1.msra.mxu0 0.0
    %60 = vmatprep.subr.mxu0 0.0
    %61 = vmatpush1.msra.mxu0 0.0
    %62 = vmatprep.subr.mxu0 0.0
    %63 = vmatpush1.msra.mxu0 0.0
    %64 = vmatprep.subr.mxu0 0.0
    %65 = vmatpush1.msra.mxu0 0.0
    %66 = vmatprep.subr.mxu0 0.0
    %67 = vmatpush1.msra.mxu0 0.0
    %68 = vmatprep.subr.mxu0 0.0
    %69 = vmatpush1.msra.mxu0 0.0
    %70 = vmatprep.subr.mxu0 0.0
    %71 = vmatpush1.msra.mxu0 0.0
    %72 = vmatprep.subr.mxu0 0.0
    %73 = vmatpush1.msra.mxu0 0.0
    %74 = vmatprep.subr.mxu0 0.0
    %75 = vmatpush1.msra.mxu0 0.0
    %76 = vmatprep.subr.mxu0 0.0
    %77 = vmatpush1.msra.mxu0 0.0
    %78 = vmatprep.subr.mxu0 0.0
    %79 = vmatpush1.msra.mxu0 0.0
    %80 = vmatprep.subr.mxu0 0.0
    %81 = vmatpush1.msra.mxu0 0.0
    %82 = vmatprep.subr.mxu0 0.0
    %83 = vmatpush1.msra.mxu0 0.0
    %84 = vmatprep.subr.mxu0 0.0
    %85 = vmatpush1.msra.mxu0 0.0
    %86 = vmatprep.subr.mxu0 0.0
    %87 = vmatpush1.msra.mxu0 0.0
    %88 = vmatprep.subr.mxu0 0.0
    %89 = vmatpush1.msra.mxu0 0.0
    %90 = vmatprep.subr.mxu0 0.0
    %91 = vmatpush1.msra.mxu0 0.0
    %92 = vmatprep.subr.mxu0 0.0
    %93 = vmatpush1.msra.mxu0 0.0
    %94 = vmatprep.subr.mxu0 0.0
    %95 = vmatpush1.msra.mxu0 0.0
    %96 = vmatprep.subr.mxu0 0.0
    %97 = vmatpush1.msra.mxu0 0.0
    %98 = vmatprep.subr.mxu0 0.0
    %99 = vmatpush1.msra.mxu0 0.0
    %100 = vmatprep.subr.mxu0 0.0
    %101 = vmatpush1.msra.mxu0 0.0
    %102 = vmatprep.subr.mxu0 0.0
    %103 = vmatpush1.msra.mxu0 0.0
    %104 = vmatprep.subr.mxu0 0.0
    %105 = vmatpush1.msra.mxu0 0.0
    %106 = vmatprep.subr.mxu0 0.0
    %107 = vmatpush1.msra.mxu0 0.0
    %108 = vmatprep.mubr.f32.mxu0 0.0
    %109 = vmatmul.mubr.f32.gmra.mrb[0].mxu0 %v39
    %v110 = vpop.f32.mrb[0].mxu0
    %v111 = vadd.f32 0.0, %v110
    %v112 = vpop.f32.mrb[0].mxu0
    %113 = vmatprep.mubr.f32.mxu0 0.0
    %114 = vmatmul.mubr.f32.gmra.mrb[0].mxu0 %v42
    %v115 = vpop.f32.mrb[0].mxu0
    %v116 = vadd.f32 0.0, %v115
    %v117 = vpop.f32.mrb[0].mxu0
    %118 = vdwg.mxu0
    %v119 = vmul.f32 %v111, %v35
    %v120 = vmul.f32 %v116, %v36
    %v121 = vsub.f32 %v119, %v120
    %v122 = vmul.f32 %v111, %v36
    %v123 = vmul.f32 %v116, %v35
    %v124 = vadd.f32 %v122, %v123
    %vm125 = vcmask 130048
    %v127 = vsel %vm125, %v34, 0
    %129 = vmatprep.subr.mxu0 0.0
    %130 = vmatpush1.msra.mxu0 %v121
    %131 = vmatprep.subr.mxu0 0.0
    %132 = vmatpush1.msra.mxu0 %v124
    %133 = vmatprep.subr.mxu0 0.0
    %134 = vmatpush1.msra.mxu0 0.0
    %135 = vmatprep.subr.mxu0 0.0
    %136 = vmatpush1.msra.mxu0 0.0
    %137 = vmatprep.subr.mxu0 0.0
    %138 = vmatpush1.msra.mxu0 0.0
    %139 = vmatprep.subr.mxu0 0.0
    %140 = vmatpush1.msra.mxu0 0.0
    %141 = vmatprep.subr.mxu0 0.0
    %142 = vmatpush1.msra.mxu0 0.0
    %143 = vmatprep.subr.mxu0 0.0
    %144 = vmatpush1.msra.mxu0 0.0
    %145 = vmatprep.subr.mxu0 0.0
    %146 = vmatpush1.msra.mxu0 0.0
    %147 = vmatprep.subr.mxu0 0.0
    %148 = vmatpush1.msra.mxu0 0.0
    %149 = vmatprep.subr.mxu0 0.0
    %150 = vmatpush1.msra.mxu0 0.0
    %151 = vmatprep.subr.mxu0 0.0
    %152 = vmatpush1.msra.mxu0 0.0
    %153 = vmatprep.subr.mxu0 0.0
    %154 = vmatpush1.msra.mxu0 0.0
    %155 = vmatprep.subr.mxu0 0.0
    %156 = vmatpush1.msra.mxu0 0.0
    %157 = vmatprep.subr.mxu0 0.0
    %158 = vmatpush1.msra.mxu0 0.0
    %159 = vmatprep.subr.mxu0 0.0
    %160 = vmatpush1.msra.mxu0 0.0
    %161 = vmatprep.subr.mxu0 0.0
    %162 = vmatpush1.msra.mxu0 0.0
    %163 = vmatprep.subr.mxu0 0.0
    %164 = vmatpush1.msra.mxu0 0.0
    %165 = vmatprep.subr.mxu0 0.0
    %166 = vmatpush1.msra.mxu0 0.0
    %167 = vmatprep.subr.mxu0 0.0
    %168 = vmatpush1.msra.mxu0 0.0
    %169 = vmatprep.subr.mxu0 0.0
    %170 = vmatpush1.msra.mxu0 0.0
    %171 = vmatprep.subr.mxu0 0.0
    %172 = vmatpush1.msra.mxu0 0.0
    %173 = vmatprep.subr.mxu0 0.0
    %174 = vmatpush1.msra.mxu0 0.0
    %175 = vmatprep.subr.mxu0 0.0
    %176 = vmatpush1.msra.mxu0 0.0
    %177 = vmatprep.subr.mxu0 0.0
    %178 = vmatpush1.msra.mxu0 0.0
    %179 = vmatprep.subr.mxu0 0.0
    %180 = vmatpush1.msra.mxu0 0.0
    %181 = vmatprep.subr.mxu0 0.0
    %182 = vmatpush1.msra.mxu0 0.0
    %183 = vmatprep.subr.mxu0 0.0
    %184 = vmatpush1.msra.mxu0 0.0
    %185 = vmatprep.subr.mxu0 0.0
    %186 = vmatpush1.msra.mxu0 0.0
    %187 = vmatprep.subr.mxu0 0.0
    %188 = vmatpush1.msra.mxu0 0.0
    %189 = vmatprep.subr.mxu0 0.0
    %190 = vmatpush1.msra.mxu0 0.0
    %191 = vmatprep.subr.mxu0 0.0
    %192 = vmatpush1.msra.mxu0 0.0
    %193 = vmatprep.mubr.f32.mxu0 0.0
    %194 = vmatmul.mubr.f32.gmra.mrb[0].mxu0 %v127
    %v195 = vpop.f32.mrb[0].mxu0
    %v196 = vadd.f32 %v30, %v195
    %v197 = vpop.f32.mrb[0].mxu0
    %198 = vdwg.mxu0
    %199 = vmatprep.subr.mxu0 0.0
    %200 = vmatpush1.msra.mxu0 %v31
    %201 = vmatprep.subr.mxu0 0.0
    %202 = vmatpush1.msra.mxu0 0.0
    %203 = vmatprep.subr.mxu0 0.0
    %204 = vmatpush1.msra.mxu0 0.0
    %205 = vmatprep.subr.mxu0 0.0
    %206 = vmatpush1.msra.mxu0 0.0
    %207 = vmatprep.subr.mxu0 0.0
    %208 = vmatpush1.msra.mxu0 0.0
    %209 = vmatprep.subr.mxu0 0.0
    %210 = vmatpush1.msra.mxu0 0.0
    %211 = vmatprep.subr.mxu0 0.0
    %212 = vmatpush1.msra.mxu0 0.0
    %213 = vmatprep.subr.mxu0 0.0
    %214 = vmatpush1.msra.mxu0 0.0
    %215 = vmatprep.subr.mxu0 0.0
    %216 = vmatpush1.msra.mxu0 0.0
    %217 = vmatprep.subr.mxu0 0.0
    %218 = vmatpush1.msra.mxu0 0.0
    %219 = vmatprep.subr.mxu0 0.0
    %220 = vmatpush1.msra.mxu0 0.0
    %221 = vmatprep.subr.mxu0 0.0
    %222 = vmatpush1.msra.mxu0 0.0
    %223 = vmatprep.subr.mxu0 0.0
    %224 = vmatpush1.msra.mxu0 0.0
    %225 = vmatprep.subr.mxu0 0.0
    %226 = vmatpush1.msra.mxu0 0.0
    %227 = vmatprep.subr.mxu0 0.0
    %228 = vmatpush1.msra.mxu0 0.0
    %229 = vmatprep.subr.mxu0 0.0
    %230 = vmatpush1.msra.mxu0 0.0
    %231 = vmatprep.subr.mxu0 0.0
    %232 = vmatpush1.msra.mxu0 0.0
    %233 = vmatprep.subr.mxu0 0.0
    %234 = vmatpush1.msra.mxu0 0.0
    %235 = vmatprep.subr.mxu0 0.0
    %236 = vmatpush1.msra.mxu0 0.0
    %237 = vmatprep.subr.mxu0 0.0
    %238 = vmatpush1.msra.mxu0 0.0
    %239 = vmatprep.subr.mxu0 0.0
    %240 = vmatpush1.msra.mxu0 0.0
    %241 = vmatprep.subr.mxu0 0.0
    %242 = vmatpush1.msra.mxu0 0.0
    %243 = vmatprep.subr.mxu0 0.0
    %244 = vmatpush1.msra.mxu0 0.0
    %245 = vmatprep.subr.mxu0 0.0
    %246 = vmatpush1.msra.mxu0 0.0
    %247 = vmatprep.subr.mxu0 0.0
    %248 = vmatpush1.msra.mxu0 0.0
    %249 = vmatprep.subr.mxu0 0.0
    %250 = vmatpush1.msra.mxu0 0.0
    %251 = vmatprep.subr.mxu0 0.0
    %252 = vmatpush1.msra.mxu0 0.0
    %253 = vmatprep.subr.mxu0 0.0
    %254 = vmatpush1.msra.mxu0 0.0
    %255 = vmatprep.subr.mxu0 0.0
    %256 = vmatpush1.msra.mxu0 0.0
    %257 = vmatprep.subr.mxu0 0.0
    %258 = vmatpush1.msra.mxu0 0.0
    %259 = vmatprep.subr.mxu0 0.0
    %260 = vmatpush1.msra.mxu0 0.0
    %261 = vmatprep.subr.mxu0 0.0
    %262 = vmatpush1.msra.mxu0 0.0
    %263 = vmatprep.mubr.f32.mxu0 0.0
    %264 = vmatmul.mubr.f32.gmra.mrb[0].mxu0 %v39
    %v265 = vpop.f32.mrb[0].mxu0
    %v266 = vadd.f32 0.0, %v265
    %v267 = vpop.f32.mrb[0].mxu0
    %268 = vmatprep.mubr.f32.mxu0 0.0
    %269 = vmatmul.mubr.f32.gmra.mrb[0].mxu0 %v42
    %v270 = vpop.f32.mrb[0].mxu0
    %v271 = vadd.f32 0.0, %v270
    %v272 = vpop.f32.mrb[0].mxu0
    %273 = vdwg.mxu0
    %v274 = vmul.f32 %v266, %v35
    %v275 = vmul.f32 %v271, %v36
    %v276 = vsub.f32 %v274, %v275
    %v277 = vmul.f32 %v266, %v36
    %v278 = vmul.f32 %v271, %v35
    %v279 = vadd.f32 %v277, %v278
    %280 = vmatprep.subr.mxu0 0.0
    %281 = vmatpush1.msra.mxu0 %v276
    %282 = vmatprep.subr.mxu0 0.0
    %283 = vmatpush1.msra.mxu0 %v279
    %284 = vmatprep.subr.mxu0 0.0
    %285 = vmatpush1.msra.mxu0 0.0
    %286 = vmatprep.subr.mxu0 0.0
    %287 = vmatpush1.msra.mxu0 0.0
    %288 = vmatprep.subr.mxu0 0.0
    %289 = vmatpush1.msra.mxu0 0.0
    %290 = vmatprep.subr.mxu0 0.0
    %291 = vmatpush1.msra.mxu0 0.0
    %292 = vmatprep.subr.mxu0 0.0
    %293 = vmatpush1.msra.mxu0 0.0
    %294 = vmatprep.subr.mxu0 0.0
    %295 = vmatpush1.msra.mxu0 0.0
    %296 = vmatprep.subr.mxu0 0.0
    %297 = vmatpush1.msra.mxu0 0.0
    %298 = vmatprep.subr.mxu0 0.0
    %299 = vmatpush1.msra.mxu0 0.0
    %300 = vmatprep.subr.mxu0 0.0
    %301 = vmatpush1.msra.mxu0 0.0
    %302 = vmatprep.subr.mxu0 0.0
    %303 = vmatpush1.msra.mxu0 0.0
    %304 = vmatprep.subr.mxu0 0.0
    %305 = vmatpush1.msra.mxu0 0.0
    %306 = vmatprep.subr.mxu0 0.0
    %307 = vmatpush1.msra.mxu0 0.0
    %308 = vmatprep.subr.mxu0 0.0
    %309 = vmatpush1.msra.mxu0 0.0
    %310 = vmatprep.subr.mxu0 0.0
    %311 = vmatpush1.msra.mxu0 0.0
    %312 = vmatprep.subr.mxu0 0.0
    %313 = vmatpush1.msra.mxu0 0.0
    %314 = vmatprep.subr.mxu0 0.0
    %315 = vmatpush1.msra.mxu0 0.0
    %316 = vmatprep.subr.mxu0 0.0
    %317 = vmatpush1.msra.mxu0 0.0
    %318 = vmatprep.subr.mxu0 0.0
    %319 = vmatpush1.msra.mxu0 0.0
    %320 = vmatprep.subr.mxu0 0.0
    %321 = vmatpush1.msra.mxu0 0.0
    %322 = vmatprep.subr.mxu0 0.0
    %323 = vmatpush1.msra.mxu0 0.0
    %324 = vmatprep.subr.mxu0 0.0
    %325 = vmatpush1.msra.mxu0 0.0
    %326 = vmatprep.subr.mxu0 0.0
    %327 = vmatpush1.msra.mxu0 0.0
    %328 = vmatprep.subr.mxu0 0.0
    %329 = vmatpush1.msra.mxu0 0.0
    %330 = vmatprep.subr.mxu0 0.0
    %331 = vmatpush1.msra.mxu0 0.0
    %332 = vmatprep.subr.mxu0 0.0
    %333 = vmatpush1.msra.mxu0 0.0
    %334 = vmatprep.subr.mxu0 0.0
    %335 = vmatpush1.msra.mxu0 0.0
    %336 = vmatprep.subr.mxu0 0.0
    %337 = vmatpush1.msra.mxu0 0.0
    %338 = vmatprep.subr.mxu0 0.0
    %339 = vmatpush1.msra.mxu0 0.0
    %340 = vmatprep.subr.mxu0 0.0
    %341 = vmatpush1.msra.mxu0 0.0
    %342 = vmatprep.subr.mxu0 0.0
    %343 = vmatpush1.msra.mxu0 0.0
    %344 = vmatprep.mubr.f32.mxu0 0.0
    %345 = vmatmul.mubr.f32.gmra.mrb[0].mxu0 %v127
    %v346 = vpop.f32.mrb[0].mxu0
    %v347 = vadd.f32 %v31, %v346
    %v348 = vpop.f32.mrb[0].mxu0
    %349 = vdwg.mxu0
    %v350 = vld [vmem:[%s4] sm:$0x1f]
    %vm351 = vcmask 261120
    %v352 = vsel %vm351, %v196, 0.0
    %353 = vadd.xlane.f32.xlu0 %v352
    %v354 = vpop.xlane.xlu0 %353
    %v355 = vsel %vm351, %v347, 0.0
    %356 = vadd.xlane.f32.xlu0 %v355
    %v357 = vpop.xlane.xlu0 %356
    %v358 = vrcp.pop 32.0
    %v359 = vmul.f32 %v354, %v358
    %v360 = vmul.f32 %v357, %v358
    %v361 = vsub.f32 %v196, %v359
    %v362 = vsub.f32 %v347, %v360
    %v363 = vmul.f32 %v361, %v361
    %v364 = vmul.f32 %v362, %v362
    %v365 = vsel %vm351, %v363, 0.0
    %366 = vadd.xlane.f32.xlu0 %v365
    %v367 = vpop.xlane.xlu0 %366
    %v368 = vsel %vm351, %v364, 0.0
    %369 = vadd.xlane.f32.xlu0 %v368
    %v370 = vpop.xlane.xlu0 %369
    %v371 = vmul.f32 %v367, %v358
    %v372 = vmul.f32 %v370, %v358
    %v373 = vadd.f32 %v371, 1e-12
    %v374 = vadd.f32 %v372, 1e-12
    %v375 = vrsqrt.pop %v373
    %v376 = vrsqrt.pop %v374
    %v377 = vmul.f32 %v361, %v375
    %v378 = vmul.f32 %v362, %v376
    %v379 = vlaneseq
    %v380 = vshrl.u32 %v379, 7
    %v381 = vsub.s32 0, %v380
    %v382 = vrot.slane %v350, %v381
    %v383 = vmul.f32 %v382, %v377
    %v384 = vmul.f32 %v382, %v378
    %v385 = vlaneseq
    %v386 = vshrl.u32 %v385, 7
    %v387 = vsub.s32 1, %v386
    %v388 = vrot.slane %v350, %v387
    %v389 = vadd.f32 %v383, %v388
    %v390 = vadd.f32 %v384, %v388
    %v391 = vsel %vm351, %v389, 0.0
    %392 = vadd.xlane.f32.xlu0 %v391
    %v393 = vpop.xlane.xlu0 %392
    %v394 = vsel %vm351, %v390, 0.0
    %395 = vadd.xlane.f32.xlu0 %v394
    %v396 = vpop.xlane.xlu0 %395
    %v397 = vmul.f32 %v393, %v358
    %v398 = vmul.f32 %v396, %v358
    %v399 = vsub.f32 %v389, %v397
    %v400 = vsub.f32 %v390, %v398
    %v401 = vmul.f32 %v399, %v399
    %v402 = vmul.f32 %v400, %v400
    %v403 = vsel %vm351, %v401, 0.0
    %404 = vadd.xlane.f32.xlu0 %v403
    %v405 = vpop.xlane.xlu0 %404
    %v406 = vsel %vm351, %v402, 0.0
    %407 = vadd.xlane.f32.xlu0 %v406
    %v408 = vpop.xlane.xlu0 %407
    %v409 = vmul.f32 %v405, %v358
    %v410 = vmul.f32 %v408, %v358
    %v411 = vadd.f32 %v409, 1e-12
    %v412 = vadd.f32 %v410, 1e-12
    %v413 = vrsqrt.pop %v411
    %v414 = vrsqrt.pop %v412
    %v415 = vmul.f32 %v399, %v413
    %v416 = vmul.f32 %v400, %v414
    %v417 = vlaneseq
    %v418 = vshrl.u32 %v417, 7
    %v419 = vsub.s32 2, %v418
    %v420 = vrot.slane %v350, %v419
    %v421 = vmul.f32 %v420, %v415
    %v422 = vmul.f32 %v420, %v416
    %v423 = vlaneseq
    %v424 = vshrl.u32 %v423, 7
    %v425 = vsub.s32 3, %v424
    %v426 = vrot.slane %v350, %v425
    %v427 = vadd.f32 %v421, %v426
    %v428 = vadd.f32 %v422, %v426
    %v429 = vld [vmem:[%s5] sm:$0xff]
    %v430 = vld [vmem:[%s5 + $0x8] sm:$0xff]
    %v431 = vld [vmem:[%s5 + $0x10] sm:$0xff]
    %v432 = vld [vmem:[%s5 + $0x18] sm:$0xff]
    %v433 = vld [vmem:[%s6] sm:$0x1]
    %v435 = vlaneseq
    %v436 = vshrl.u32 %v435, 7
    %v437 = vsub.s32 0, %v436
    %v438 = vrot.slane %v433, %v437
    %v441 = vsel %vm351, %v427, 0
    %v444 = vsel %vm351, %v428, 0
    %446 = vmatprep.subr.mxu0 0.0
    %447 = vmatpush1.msra.mxu0 %v429
    %448 = vmatprep.subr.mxu0 0.0
    %449 = vmatpush1.msra.mxu0 %v430
    %450 = vmatprep.subr.mxu0 0.0
    %451 = vmatpush1.msra.mxu0 %v431
    %452 = vmatprep.subr.mxu0 0.0
    %453 = vmatpush1.msra.mxu0 %v432
    %454 = vmatprep.subr.mxu0 0.0
    %455 = vmatpush1.msra.mxu0 0.0
    %456 = vmatprep.subr.mxu0 0.0
    %457 = vmatpush1.msra.mxu0 0.0
    %458 = vmatprep.subr.mxu0 0.0
    %459 = vmatpush1.msra.mxu0 0.0
    %460 = vmatprep.subr.mxu0 0.0
    %461 = vmatpush1.msra.mxu0 0.0
    %462 = vmatprep.subr.mxu0 0.0
    %463 = vmatpush1.msra.mxu0 0.0
    %464 = vmatprep.subr.mxu0 0.0
    %465 = vmatpush1.msra.mxu0 0.0
    %466 = vmatprep.subr.mxu0 0.0
    %467 = vmatpush1.msra.mxu0 0.0
    %468 = vmatprep.subr.mxu0 0.0
    %469 = vmatpush1.msra.mxu0 0.0
    %470 = vmatprep.subr.mxu0 0.0
    %471 = vmatpush1.msra.mxu0 0.0
    %472 = vmatprep.subr.mxu0 0.0
    %473 = vmatpush1.msra.mxu0 0.0
    %474 = vmatprep.subr.mxu0 0.0
    %475 = vmatpush1.msra.mxu0 0.0
    %476 = vmatprep.subr.mxu0 0.0
    %477 = vmatpush1.msra.mxu0 0.0
    %478 = vmatprep.subr.mxu0 0.0
    %479 = vmatpush1.msra.mxu0 0.0
    %480 = vmatprep.subr.mxu0 0.0
    %481 = vmatpush1.msra.mxu0 0.0
    %482 = vmatprep.subr.mxu0 0.0
    %483 = vmatpush1.msra.mxu0 0.0
    %484 = vmatprep.subr.mxu0 0.0
    %485 = vmatpush1.msra.mxu0 0.0
    %486 = vmatprep.subr.mxu0 0.0
    %487 = vmatpush1.msra.mxu0 0.0
    %488 = vmatprep.subr.mxu0 0.0
    %489 = vmatpush1.msra.mxu0 0.0
    %490 = vmatprep.subr.mxu0 0.0
    %491 = vmatpush1.msra.mxu0 0.0
    %492 = vmatprep.subr.mxu0 0.0
    %493 = vmatpush1.msra.mxu0 0.0
    %494 = vmatprep.subr.mxu0 0.0
    %495 = vmatpush1.msra.mxu0 0.0
    %496 = vmatprep.subr.mxu0 0.0
    %497 = vmatpush1.msra.mxu0 0.0
    %498 = vmatprep.subr.mxu0 0.0
    %499 = vmatpush1.msra.mxu0 0.0
    %500 = vmatprep.subr.mxu0 0.0
    %501 = vmatpush1.msra.mxu0 0.0
    %502 = vmatprep.subr.mxu0 0.0
    %503 = vmatpush1.msra.mxu0 0.0
    %504 = vmatprep.subr.mxu0 0.0
    %505 = vmatpush1.msra.mxu0 0.0
    %506 = vmatprep.subr.mxu0 0.0
    %507 = vmatpush1.msra.mxu0 0.0
    %508 = vmatprep.subr.mxu0 0.0
    %509 = vmatpush1.msra.mxu0 0.0
    %510 = vmatprep.mubr.f32.mxu0 0.0
    %511 = vmatmul.mubr.f32.gmra.mrb[0].mxu0 %v441
    %v512 = vpop.f32.mrb[0].mxu0
    %v513 = vadd.f32 %v438, %v512
    %v514 = vpop.f32.mrb[0].mxu0
    %515 = vmatprep.mubr.f32.mxu0 0.0
    %516 = vmatmul.mubr.f32.gmra.mrb[0].mxu0 %v444
    %v517 = vpop.f32.mrb[0].mxu0
    %v518 = vadd.f32 %v438, %v517
    %v519 = vpop.f32.mrb[0].mxu0
    %520 = vdwg.mxu0
    %v521 = vmax.f32 %v513, 0.0
    %v522 = vmax.f32 %v518, 0.0
    %v523 = vld [vmem:[%s7] sm:$0xff]
    %v524 = vld [vmem:[%s7 + $0x8] sm:$0xff]
    %v525 = vld [vmem:[%s7 + $0x10] sm:$0xff]
    %v526 = vld [vmem:[%s7 + $0x18] sm:$0xff]
    %v527 = vld [vmem:[%s7 + $0x20] sm:$0xff]
    %v528 = vld [vmem:[%s7 + $0x28] sm:$0xff]
    %v529 = vld [vmem:[%s7 + $0x30] sm:$0xff]
    %v530 = vld [vmem:[%s7 + $0x38] sm:$0xff]
    %v531 = vlaneseq
    %v532 = vshrl.u32 %v531, 7
    %v533 = vsub.s32 4, %v532
    %v534 = vrot.slane %v350, %v533
    %vm535 = vcmask 523264
    %v537 = vsel %vm535, %v521, 0
    %v540 = vsel %vm535, %v522, 0
    %542 = vmatprep.subr.mxu0 0.0
    %543 = vmatpush1.msra.mxu0 %v523
    %544 = vmatprep.subr.mxu0 0.0
    %545 = vmatpush1.msra.mxu0 %v524
    %546 = vmatprep.subr.mxu0 0.0
    %547 = vmatpush1.msra.mxu0 %v525
    %548 = vmatprep.subr.mxu0 0.0
    %549 = vmatpush1.msra.mxu0 %v526
    %550 = vmatprep.subr.mxu0 0.0
    %551 = vmatpush1.msra.mxu0 %v527
    %552 = vmatprep.subr.mxu0 0.0
    %553 = vmatpush1.msra.mxu0 %v528
    %554 = vmatprep.subr.mxu0 0.0
    %555 = vmatpush1.msra.mxu0 %v529
    %556 = vmatprep.subr.mxu0 0.0
    %557 = vmatpush1.msra.mxu0 %v530
    %558 = vmatprep.subr.mxu0 0.0
    %559 = vmatpush1.msra.mxu0 0.0
    %560 = vmatprep.subr.mxu0 0.0
    %561 = vmatpush1.msra.mxu0 0.0
    %562 = vmatprep.subr.mxu0 0.0
    %563 = vmatpush1.msra.mxu0 0.0
    %564 = vmatprep.subr.mxu0 0.0
    %565 = vmatpush1.msra.mxu0 0.0
    %566 = vmatprep.subr.mxu0 0.0
    %567 = vmatpush1.msra.mxu0 0.0
    %568 = vmatprep.subr.mxu0 0.0
    %569 = vmatpush1.msra.mxu0 0.0
    %570 = vmatprep.subr.mxu0 0.0
    %571 = vmatpush1.msra.mxu0 0.0
    %572 = vmatprep.subr.mxu0 0.0
    %573 = vmatpush1.msra.mxu0 0.0
    %574 = vmatprep.subr.mxu0 0.0
    %575 = vmatpush1.msra.mxu0 0.0
    %576 = vmatprep.subr.mxu0 0.0
    %577 = vmatpush1.msra.mxu0 0.0
    %578 = vmatprep.subr.mxu0 0.0
    %579 = vmatpush1.msra.mxu0 0.0
    %580 = vmatprep.subr.mxu0 0.0
    %581 = vmatpush1.msra.mxu0 0.0
    %582 = vmatprep.subr.mxu0 0.0
    %583 = vmatpush1.msra.mxu0 0.0
    %584 = vmatprep.subr.mxu0 0.0
    %585 = vmatpush1.msra.mxu0 0.0
    %586 = vmatprep.subr.mxu0 0.0
    %587 = vmatpush1.msra.mxu0 0.0
    %588 = vmatprep.subr.mxu0 0.0
    %589 = vmatpush1.msra.mxu0 0.0
    %590 = vmatprep.subr.mxu0 0.0
    %591 = vmatpush1.msra.mxu0 0.0
    %592 = vmatprep.subr.mxu0 0.0
    %593 = vmatpush1.msra.mxu0 0.0
    %594 = vmatprep.subr.mxu0 0.0
    %595 = vmatpush1.msra.mxu0 0.0
    %596 = vmatprep.subr.mxu0 0.0
    %597 = vmatpush1.msra.mxu0 0.0
    %598 = vmatprep.subr.mxu0 0.0
    %599 = vmatpush1.msra.mxu0 0.0
    %600 = vmatprep.subr.mxu0 0.0
    %601 = vmatpush1.msra.mxu0 0.0
    %602 = vmatprep.subr.mxu0 0.0
    %603 = vmatpush1.msra.mxu0 0.0
    %604 = vmatprep.subr.mxu0 0.0
    %605 = vmatpush1.msra.mxu0 0.0
    %606 = vmatprep.mubr.f32.mxu0 0.0
    %607 = vmatmul.mubr.f32.gmra.mrb[0].mxu0 %v537
    %v608 = vpop.f32.mrb[0].mxu0
    %v609 = vadd.f32 %v534, %v608
    %v610 = vpop.f32.mrb[0].mxu0
    %611 = vmatprep.mubr.f32.mxu0 0.0
    %612 = vmatmul.mubr.f32.gmra.mrb[0].mxu0 %v540
    %v613 = vpop.f32.mrb[0].mxu0
    %v614 = vadd.f32 %v534, %v613
    %v615 = vpop.f32.mrb[0].mxu0
    %616 = vdwg.mxu0
    %v617 = vadd.f32 %v609, %v389
    %v618 = vadd.f32 %v614, %v390
    %619 = vst.msk [vmem:[#allocation2] sm:$0xff] %vm351, %v617
    %620 = vst.msk [vmem:[#allocation2 + $0x8] sm:$0xff] %vm351, %v618
    // Predicated region
    $region34: #{tpu_custom_call.1} parent=1 // pred_check
      _
    $region35: #{tpu_custom_call.1} parent=1 // pred_check_branch
      %622 = sbr.rel (0) target = $region37
    $region36: #{tpu_custom_call.1} parent=1 // pred_region
      %s624 = ssub.s32 256, 256
      %625 = vsyncadd [#allocation3], %s624
      %s626 = sshll.u32 [#allocation2], 4
      %s627 = int_to_ptr.vmem [resolvable:$true] %s626
      %632 = dma.vmem_to_hbm [thread:$0]  %s627, 256, %s8, [#allocation3], 128, 128, 8
    $region37: #{tpu_custom_call.1} parent=1 // pred_fallthru
      _
    // Predicated region
    $region38: #{tpu_custom_call.1} parent=1 // pred_check
      _
    $region39: #{tpu_custom_call.1} parent=1 // pred_check_branch
      %634 = sbr.rel (0) target = $region41
    $region40: #{tpu_custom_call.1} parent=1 // pred_region
      %635 = dma.done [#allocation3], 256
    $region41: #{tpu_custom_call.1} parent=1 // pred_fallthru
      _
    %636 = vsyncpa [#allocation3], 1

// kernel: tpu_custom_call.1
$region0: #{tpu_custom_call.1}
  #allocation0 [shape = 'u32[]', space=smem, size = 0x4, offset = 0x4, fixed_abs, tag = 'smem constant byte address 0x4 - core index']
  #allocation1 [shape = 'u32[144,128]{1,0:T(1,128)}', space=vmem, size = 0x12000, scoped, tag = 'internal scratch']
  %s0 = inlined_call_operand.vmem [shape: f32[2,8,32], index: 0, kind: input, shape index: {}]
  %s1 = inlined_call_operand.vmem [shape: f32[16,8], index: 1, kind: input, shape index: {}]
  %s2 = inlined_call_operand.vmem [shape: f32[8,16], index: 2, kind: input, shape index: {}]
  %s3 = inlined_call_operand.vmem [shape: f32[16,32], index: 3, kind: input, shape index: {}]
  %s4 = inlined_call_operand.vmem [shape: f32[5,32], index: 4, kind: input, shape index: {}]
  %s5 = inlined_call_operand.vmem [shape: f32[32,64], index: 5, kind: input, shape index: {}]
  %s6 = inlined_call_operand.vmem [shape: f32[1,64], index: 6, kind: input, shape index: {}]
  %s7 = inlined_call_operand.vmem [shape: f32[64,32], index: 7, kind: input, shape index: {}]
  %s8 = inlined_call_operand.hbm [shape: f32[2,8,32], index: 8, kind: output, shape index: {}]
  %s9 = sld [smem:[#allocation0]]
  $region42: #{tpu_custom_call.1} parent=0
    _
  %s11 = ssub.s32 1, %s9
  %s12 = scalar_select 0, %s11, %s9
  $region1: #{tpu_custom_call.1} parent=0
    #allocation2 [shape = 'u8[8192]{0}', space=vmem, size = 0x2000, scoped, tag = 'output window, operand 0, single buffered']
    #allocation3 [shape = 's32[1]{0}', space=sflag, size = 0x4, scoped, tag = 'scoped memory for tpu_custom_call.1']
    %13 = vsyncpa [#allocation3], 0
    // Predicated region
    $region2: #{tpu_custom_call.1} parent=1 // pred_check
      _
    $region3: #{tpu_custom_call.1} parent=1 // pred_check_branch
      %15 = sbr.rel (0) target = $region5
    $region4: #{tpu_custom_call.1} parent=1 // pred_region
      _
    $region5: #{tpu_custom_call.1} parent=1 // pred_fallthru
      _
    // Predicated region
    $region6: #{tpu_custom_call.1} parent=1 // pred_check
      _
    $region7: #{tpu_custom_call.1} parent=1 // pred_check_branch
      %17 = sbr.rel (0) target = $region9
    $region8: #{tpu_custom_call.1} parent=1 // pred_region
      _
    $region9: #{tpu_custom_call.1} parent=1 // pred_fallthru
      _
    // Predicated region
    $region10: #{tpu_custom_call.1} parent=1 // pred_check
      _
    $region11: #{tpu_custom_call.1} parent=1 // pred_check_branch
      %19 = sbr.rel (0) target = $region13
    $region12: #{tpu_custom_call.1} parent=1 // pred_region
      _
    $region13: #{tpu_custom_call.1} parent=1 // pred_fallthru
      _
    // Predicated region
    $region14: #{tpu_custom_call.1} parent=1 // pred_check
      _
    $region15: #{tpu_custom_call.1} parent=1 // pred_check_branch
      %21 = sbr.rel (0) target = $region17
    $region16: #{tpu_custom_call.1} parent=1 // pred_region
      _
    $region17: #{tpu_custom_call.1} parent=1 // pred_fallthru
      _
    // Predicated region
    $region18: #{tpu_custom_call.1} parent=1 // pred_check
      _
    $region19: #{tpu_custom_call.1} parent=1 // pred_check_branch
      %23 = sbr.rel (0) target = $region21
    $region20: #{tpu_custom_call.1} parent=1 // pred_region
      _
    $region21: #{tpu_custom_call.1} parent=1 // pred_fallthru
      _
    // Predicated region
    $region22: #{tpu_custom_call.1} parent=1 // pred_check
      _
    $region23: #{tpu_custom_call.1} parent=1 // pred_check_branch
      %25 = sbr.rel (0) target = $region25
    $region24: #{tpu_custom_call.1} parent=1 // pred_region
      _
    $region25: #{tpu_custom_call.1} parent=1 // pred_fallthru
      _
    // Predicated region
    $region26: #{tpu_custom_call.1} parent=1 // pred_check
      _
    $region27: #{tpu_custom_call.1} parent=1 // pred_check_branch
      %27 = sbr.rel (0) target = $region29
    $region28: #{tpu_custom_call.1} parent=1 // pred_region
      _
    $region29: #{tpu_custom_call.1} parent=1 // pred_fallthru
      _
    // Predicated region
    $region30: #{tpu_custom_call.1} parent=1 // pred_check
      _
    $region31: #{tpu_custom_call.1} parent=1 // pred_check_branch
      %29 = sbr.rel (0) target = $region33
    $region32: #{tpu_custom_call.1} parent=1 // pred_region
      _
    $region33: #{tpu_custom_call.1} parent=1 // pred_fallthru
      _
    %v30 = vld [vmem:[%s0] sm:$0xff]
    %v31 = vld [vmem:[%s0 + $0x8] sm:$0xff]
    %v32 = vld [vmem:[%s1] sm:$0xff]
    %v33 = vld [vmem:[%s1 + $0x8] sm:$0xff]
    %v34 = vld [vmem:[%s2] sm:$0xff]
    %v35 = vld [vmem:[%s3] sm:$0xff]
    %v36 = vld [vmem:[%s3 + $0x8] sm:$0xff]
    %vm37 = vcmask 64512
    %v39 = vsel %vm37, %v32, 0
    %v42 = vsel %vm37, %v33, 0
    %44 = vmatprep.subr.mxu0 0.0
    %45 = vmatpush1.msra.mxu0 %v30
    %46 = vmatprep.subr.mxu0 0.0
    %47 = vmatpush1.msra.mxu0 0.0
    %48 = vmatprep.subr.mxu0 0.0
    %49 = vmatpush1.msra.mxu0 0.0
    %50 = vmatprep.subr.mxu0 0.0
    %51 = vmatpush1.msra.mxu0 0.0
    %52 = vmatprep.subr.mxu0 0.0
    %53 = vmatpush1.msra.mxu0 0.0
    %54 = vmatprep.subr.mxu0 0.0
    %55 = vmatpush1.msra.mxu0 0.0
    %56 = vmatprep.subr.mxu0 0.0
    %57 = vmatpush1.msra.mxu0 0.0
    %58 = vmatprep.subr.mxu0 0.0
    %59 = vmatpush1.msra.mxu0 0.0
    %60 = vmatprep.subr.mxu0 0.0
    %61 = vmatpush1.msra.mxu0 0.0
    %62 = vmatprep.subr.mxu0 0.0
    %63 = vmatpush1.msra.mxu0 0.0
    %64 = vmatprep.subr.mxu0 0.0
    %65 = vmatpush1.msra.mxu0 0.0
    %66 = vmatprep.subr.mxu0 0.0
    %67 = vmatpush1.msra.mxu0 0.0
    %68 = vmatprep.subr.mxu0 0.0
    %69 = vmatpush1.msra.mxu0 0.0
    %70 = vmatprep.subr.mxu0 0.0
    %71 = vmatpush1.msra.mxu0 0.0
    %72 = vmatprep.subr.mxu0 0.0
    %73 = vmatpush1.msra.mxu0 0.0
    %74 = vmatprep.subr.mxu0 0.0
    %75 = vmatpush1.msra.mxu0 0.0
    %76 = vmatprep.subr.mxu0 0.0
    %77 = vmatpush1.msra.mxu0 0.0
    %78 = vmatprep.subr.mxu0 0.0
    %79 = vmatpush1.msra.mxu0 0.0
    %80 = vmatprep.subr.mxu0 0.0
    %81 = vmatpush1.msra.mxu0 0.0
    %82 = vmatprep.subr.mxu0 0.0
    %83 = vmatpush1.msra.mxu0 0.0
    %84 = vmatprep.subr.mxu0 0.0
    %85 = vmatpush1.msra.mxu0 0.0
    %86 = vmatprep.subr.mxu0 0.0
    %87 = vmatpush1.msra.mxu0 0.0
    %88 = vmatprep.subr.mxu0 0.0
    %89 = vmatpush1.msra.mxu0 0.0
    %90 = vmatprep.subr.mxu0 0.0
    %91 = vmatpush1.msra.mxu0 0.0
    %92 = vmatprep.subr.mxu0 0.0
    %93 = vmatpush1.msra.mxu0 0.0
    %94 = vmatprep.subr.mxu0 0.0
    %95 = vmatpush1.msra.mxu0 0.0
    %96 = vmatprep.subr.mxu0 0.0
    %97 = vmatpush1.msra.mxu0 0.0
    %98 = vmatprep.subr.mxu0 0.0
    %99 = vmatpush1.msra.mxu0 0.0
    %100 = vmatprep.subr.mxu0 0.0
    %101 = vmatpush1.msra.mxu0 0.0
    %102 = vmatprep.subr.mxu0 0.0
    %103 = vmatpush1.msra.mxu0 0.0
    %104 = vmatprep.subr.mxu0 0.0
    %105 = vmatpush1.msra.mxu0 0.0
    %106 = vmatprep.subr.mxu0 0.0
    %107 = vmatpush1.msra.mxu0 0.0
    %108 = vmatprep.mubr.f32.mxu0 0.0
    %109 = vmatmul.mubr.f32.gmra.mrb[0].mxu0 %v39
    %v110 = vpop.f32.mrb[0].mxu0
    %v111 = vadd.f32 0.0, %v110
    %v112 = vpop.f32.mrb[0].mxu0
    %113 = vmatprep.mubr.f32.mxu0 0.0
    %114 = vmatmul.mubr.f32.gmra.mrb[0].mxu0 %v42
    %v115 = vpop.f32.mrb[0].mxu0
    %v116 = vadd.f32 0.0, %v115
    %v117 = vpop.f32.mrb[0].mxu0
    %118 = vdwg.mxu0
    %v119 = vmul.f32 %v111, %v35
    %v120 = vmul.f32 %v116, %v36
    %v121 = vsub.f32 %v119, %v120
    %v122 = vmul.f32 %v111, %v36
    %v123 = vmul.f32 %v116, %v35
    %v124 = vadd.f32 %v122, %v123
    %vm125 = vcmask 130048
    %v127 = vsel %vm125, %v34, 0
    %129 = vmatprep.subr.mxu0 0.0
    %130 = vmatpush1.msra.mxu0 %v121
    %131 = vmatprep.subr.mxu0 0.0
    %132 = vmatpush1.msra.mxu0 %v124
    %133 = vmatprep.subr.mxu0 0.0
    %134 = vmatpush1.msra.mxu0 0.0
    %135 = vmatprep.subr.mxu0 0.0
    %136 = vmatpush1.msra.mxu0 0.0
    %137 = vmatprep.subr.mxu0 0.0
    %138 = vmatpush1.msra.mxu0 0.0
    %139 = vmatprep.subr.mxu0 0.0
    %140 = vmatpush1.msra.mxu0 0.0
    %141 = vmatprep.subr.mxu0 0.0
    %142 = vmatpush1.msra.mxu0 0.0
    %143 = vmatprep.subr.mxu0 0.0
    %144 = vmatpush1.msra.mxu0 0.0
    %145 = vmatprep.subr.mxu0 0.0
    %146 = vmatpush1.msra.mxu0 0.0
    %147 = vmatprep.subr.mxu0 0.0
    %148 = vmatpush1.msra.mxu0 0.0
    %149 = vmatprep.subr.mxu0 0.0
    %150 = vmatpush1.msra.mxu0 0.0
    %151 = vmatprep.subr.mxu0 0.0
    %152 = vmatpush1.msra.mxu0 0.0
    %153 = vmatprep.subr.mxu0 0.0
    %154 = vmatpush1.msra.mxu0 0.0
    %155 = vmatprep.subr.mxu0 0.0
    %156 = vmatpush1.msra.mxu0 0.0
    %157 = vmatprep.subr.mxu0 0.0
    %158 = vmatpush1.msra.mxu0 0.0
    %159 = vmatprep.subr.mxu0 0.0
    %160 = vmatpush1.msra.mxu0 0.0
    %161 = vmatprep.subr.mxu0 0.0
    %162 = vmatpush1.msra.mxu0 0.0
    %163 = vmatprep.subr.mxu0 0.0
    %164 = vmatpush1.msra.mxu0 0.0
    %165 = vmatprep.subr.mxu0 0.0
    %166 = vmatpush1.msra.mxu0 0.0
    %167 = vmatprep.subr.mxu0 0.0
    %168 = vmatpush1.msra.mxu0 0.0
    %169 = vmatprep.subr.mxu0 0.0
    %170 = vmatpush1.msra.mxu0 0.0
    %171 = vmatprep.subr.mxu0 0.0
    %172 = vmatpush1.msra.mxu0 0.0
    %173 = vmatprep.subr.mxu0 0.0
    %174 = vmatpush1.msra.mxu0 0.0
    %175 = vmatprep.subr.mxu0 0.0
    %176 = vmatpush1.msra.mxu0 0.0
    %177 = vmatprep.subr.mxu0 0.0
    %178 = vmatpush1.msra.mxu0 0.0
    %179 = vmatprep.subr.mxu0 0.0
    %180 = vmatpush1.msra.mxu0 0.0
    %181 = vmatprep.subr.mxu0 0.0
    %182 = vmatpush1.msra.mxu0 0.0
    %183 = vmatprep.subr.mxu0 0.0
    %184 = vmatpush1.msra.mxu0 0.0
    %185 = vmatprep.subr.mxu0 0.0
    %186 = vmatpush1.msra.mxu0 0.0
    %187 = vmatprep.subr.mxu0 0.0
    %188 = vmatpush1.msra.mxu0 0.0
    %189 = vmatprep.subr.mxu0 0.0
    %190 = vmatpush1.msra.mxu0 0.0
    %191 = vmatprep.subr.mxu0 0.0
    %192 = vmatpush1.msra.mxu0 0.0
    %193 = vmatprep.mubr.f32.mxu0 0.0
    %194 = vmatmul.mubr.f32.gmra.mrb[0].mxu0 %v127
    %v195 = vpop.f32.mrb[0].mxu0
    %v196 = vadd.f32 %v30, %v195
    %v197 = vpop.f32.mrb[0].mxu0
    %198 = vdwg.mxu0
    %199 = vmatprep.subr.mxu0 0.0
    %200 = vmatpush1.msra.mxu0 %v31
    %201 = vmatprep.subr.mxu0 0.0
    %202 = vmatpush1.msra.mxu0 0.0
    %203 = vmatprep.subr.mxu0 0.0
    %204 = vmatpush1.msra.mxu0 0.0
    %205 = vmatprep.subr.mxu0 0.0
    %206 = vmatpush1.msra.mxu0 0.0
    %207 = vmatprep.subr.mxu0 0.0
    %208 = vmatpush1.msra.mxu0 0.0
    %209 = vmatprep.subr.mxu0 0.0
    %210 = vmatpush1.msra.mxu0 0.0
    %211 = vmatprep.subr.mxu0 0.0
    %212 = vmatpush1.msra.mxu0 0.0
    %213 = vmatprep.subr.mxu0 0.0
    %214 = vmatpush1.msra.mxu0 0.0
    %215 = vmatprep.subr.mxu0 0.0
    %216 = vmatpush1.msra.mxu0 0.0
    %217 = vmatprep.subr.mxu0 0.0
    %218 = vmatpush1.msra.mxu0 0.0
    %219 = vmatprep.subr.mxu0 0.0
    %220 = vmatpush1.msra.mxu0 0.0
    %221 = vmatprep.subr.mxu0 0.0
    %222 = vmatpush1.msra.mxu0 0.0
    %223 = vmatprep.subr.mxu0 0.0
    %224 = vmatpush1.msra.mxu0 0.0
    %225 = vmatprep.subr.mxu0 0.0
    %226 = vmatpush1.msra.mxu0 0.0
    %227 = vmatprep.subr.mxu0 0.0
    %228 = vmatpush1.msra.mxu0 0.0
    %229 = vmatprep.subr.mxu0 0.0
    %230 = vmatpush1.msra.mxu0 0.0
    %231 = vmatprep.subr.mxu0 0.0
    %232 = vmatpush1.msra.mxu0 0.0
    %233 = vmatprep.subr.mxu0 0.0
    %234 = vmatpush1.msra.mxu0 0.0
    %235 = vmatprep.subr.mxu0 0.0
    %236 = vmatpush1.msra.mxu0 0.0
    %237 = vmatprep.subr.mxu0 0.0
    %238 = vmatpush1.msra.mxu0 0.0
    %239 = vmatprep.subr.mxu0 0.0
    %240 = vmatpush1.msra.mxu0 0.0
    %241 = vmatprep.subr.mxu0 0.0
    %242 = vmatpush1.msra.mxu0 0.0
    %243 = vmatprep.subr.mxu0 0.0
    %244 = vmatpush1.msra.mxu0 0.0
    %245 = vmatprep.subr.mxu0 0.0
    %246 = vmatpush1.msra.mxu0 0.0
    %247 = vmatprep.subr.mxu0 0.0
    %248 = vmatpush1.msra.mxu0 0.0
    %249 = vmatprep.subr.mxu0 0.0
    %250 = vmatpush1.msra.mxu0 0.0
    %251 = vmatprep.subr.mxu0 0.0
    %252 = vmatpush1.msra.mxu0 0.0
    %253 = vmatprep.subr.mxu0 0.0
    %254 = vmatpush1.msra.mxu0 0.0
    %255 = vmatprep.subr.mxu0 0.0
    %256 = vmatpush1.msra.mxu0 0.0
    %257 = vmatprep.subr.mxu0 0.0
    %258 = vmatpush1.msra.mxu0 0.0
    %259 = vmatprep.subr.mxu0 0.0
    %260 = vmatpush1.msra.mxu0 0.0
    %261 = vmatprep.subr.mxu0 0.0
    %262 = vmatpush1.msra.mxu0 0.0
    %263 = vmatprep.mubr.f32.mxu0 0.0
    %264 = vmatmul.mubr.f32.gmra.mrb[0].mxu0 %v39
    %v265 = vpop.f32.mrb[0].mxu0
    %v266 = vadd.f32 0.0, %v265
    %v267 = vpop.f32.mrb[0].mxu0
    %268 = vmatprep.mubr.f32.mxu0 0.0
    %269 = vmatmul.mubr.f32.gmra.mrb[0].mxu0 %v42
    %v270 = vpop.f32.mrb[0].mxu0
    %v271 = vadd.f32 0.0, %v270
    %v272 = vpop.f32.mrb[0].mxu0
    %273 = vdwg.mxu0
    %v274 = vmul.f32 %v266, %v35
    %v275 = vmul.f32 %v271, %v36
    %v276 = vsub.f32 %v274, %v275
    %v277 = vmul.f32 %v266, %v36
    %v278 = vmul.f32 %v271, %v35
    %v279 = vadd.f32 %v277, %v278
    %280 = vmatprep.subr.mxu0 0.0
    %281 = vmatpush1.msra.mxu0 %v276
    %282 = vmatprep.subr.mxu0 0.0
    %283 = vmatpush1.msra.mxu0 %v279
    %284 = vmatprep.subr.mxu0 0.0
    %285 = vmatpush1.msra.mxu0 0.0
    %286 = vmatprep.subr.mxu0 0.0
    %287 = vmatpush1.msra.mxu0 0.0
    %288 = vmatprep.subr.mxu0 0.0
    %289 = vmatpush1.msra.mxu0 0.0
    %290 = vmatprep.subr.mxu0 0.0
    %291 = vmatpush1.msra.mxu0 0.0
    %292 = vmatprep.subr.mxu0 0.0
    %293 = vmatpush1.msra.mxu0 0.0
    %294 = vmatprep.subr.mxu0 0.0
    %295 = vmatpush1.msra.mxu0 0.0
    %296 = vmatprep.subr.mxu0 0.0
    %297 = vmatpush1.msra.mxu0 0.0
    %298 = vmatprep.subr.mxu0 0.0
    %299 = vmatpush1.msra.mxu0 0.0
    %300 = vmatprep.subr.mxu0 0.0
    %301 = vmatpush1.msra.mxu0 0.0
    %302 = vmatprep.subr.mxu0 0.0
    %303 = vmatpush1.msra.mxu0 0.0
    %304 = vmatprep.subr.mxu0 0.0
    %305 = vmatpush1.msra.mxu0 0.0
    %306 = vmatprep.subr.mxu0 0.0
    %307 = vmatpush1.msra.mxu0 0.0
    %308 = vmatprep.subr.mxu0 0.0
    %309 = vmatpush1.msra.mxu0 0.0
    %310 = vmatprep.subr.mxu0 0.0
    %311 = vmatpush1.msra.mxu0 0.0
    %312 = vmatprep.subr.mxu0 0.0
    %313 = vmatpush1.msra.mxu0 0.0
    %314 = vmatprep.subr.mxu0 0.0
    %315 = vmatpush1.msra.mxu0 0.0
    %316 = vmatprep.subr.mxu0 0.0
    %317 = vmatpush1.msra.mxu0 0.0
    %318 = vmatprep.subr.mxu0 0.0
    %319 = vmatpush1.msra.mxu0 0.0
    %320 = vmatprep.subr.mxu0 0.0
    %321 = vmatpush1.msra.mxu0 0.0
    %322 = vmatprep.subr.mxu0 0.0
    %323 = vmatpush1.msra.mxu0 0.0
    %324 = vmatprep.subr.mxu0 0.0
    %325 = vmatpush1.msra.mxu0 0.0
    %326 = vmatprep.subr.mxu0 0.0
    %327 = vmatpush1.msra.mxu0 0.0
    %328 = vmatprep.subr.mxu0 0.0
    %329 = vmatpush1.msra.mxu0 0.0
    %330 = vmatprep.subr.mxu0 0.0
    %331 = vmatpush1.msra.mxu0 0.0
    %332 = vmatprep.subr.mxu0 0.0
    %333 = vmatpush1.msra.mxu0 0.0
    %334 = vmatprep.subr.mxu0 0.0
    %335 = vmatpush1.msra.mxu0 0.0
    %336 = vmatprep.subr.mxu0 0.0
    %337 = vmatpush1.msra.mxu0 0.0
    %338 = vmatprep.subr.mxu0 0.0
    %339 = vmatpush1.msra.mxu0 0.0
    %340 = vmatprep.subr.mxu0 0.0
    %341 = vmatpush1.msra.mxu0 0.0
    %342 = vmatprep.subr.mxu0 0.0
    %343 = vmatpush1.msra.mxu0 0.0
    %344 = vmatprep.mubr.f32.mxu0 0.0
    %345 = vmatmul.mubr.f32.gmra.mrb[0].mxu0 %v127
    %v346 = vpop.f32.mrb[0].mxu0
    %v347 = vadd.f32 %v31, %v346
    %v348 = vpop.f32.mrb[0].mxu0
    %349 = vdwg.mxu0
    %v350 = vld [vmem:[%s4] sm:$0x1f]
    %vm351 = vcmask 261120
    %v352 = vsel %vm351, %v196, 0.0
    %353 = vadd.xlane.f32.xlu0 %v352
    %v354 = vpop.xlane.xlu0 %353
    %v355 = vsel %vm351, %v347, 0.0
    %356 = vadd.xlane.f32.xlu0 %v355
    %v357 = vpop.xlane.xlu0 %356
    %v358 = vrcp.pop 32.0
    %v359 = vmul.f32 %v354, %v358
    %v360 = vmul.f32 %v357, %v358
    %v361 = vsub.f32 %v196, %v359
    %v362 = vsub.f32 %v347, %v360
    %v363 = vmul.f32 %v361, %v361
    %v364 = vmul.f32 %v362, %v362
    %v365 = vsel %vm351, %v363, 0.0
    %366 = vadd.xlane.f32.xlu0 %v365
    %v367 = vpop.xlane.xlu0 %366
    %v368 = vsel %vm351, %v364, 0.0
    %369 = vadd.xlane.f32.xlu0 %v368
    %v370 = vpop.xlane.xlu0 %369
    %v371 = vmul.f32 %v367, %v358
    %v372 = vmul.f32 %v370, %v358
    %v373 = vadd.f32 %v371, 1e-12
    %v374 = vadd.f32 %v372, 1e-12
    %v375 = vrsqrt.pop %v373
    %v376 = vrsqrt.pop %v374
    %v377 = vmul.f32 %v361, %v375
    %v378 = vmul.f32 %v362, %v376
    %v379 = vlaneseq
    %v380 = vshrl.u32 %v379, 7
    %v381 = vsub.s32 0, %v380
    %v382 = vrot.slane %v350, %v381
    %v383 = vmul.f32 %v382, %v377
    %v384 = vmul.f32 %v382, %v378
    %v385 = vlaneseq
    %v386 = vshrl.u32 %v385, 7
    %v387 = vsub.s32 1, %v386
    %v388 = vrot.slane %v350, %v387
    %v389 = vadd.f32 %v383, %v388
    %v390 = vadd.f32 %v384, %v388
    %v391 = vsel %vm351, %v389, 0.0
    %392 = vadd.xlane.f32.xlu0 %v391
    %v393 = vpop.xlane.xlu0 %392
    %v394 = vsel %vm351, %v390, 0.0
    %395 = vadd.xlane.f32.xlu0 %v394
    %v396 = vpop.xlane.xlu0 %395
    %v397 = vmul.f32 %v393, %v358
    %v398 = vmul.f32 %v396, %v358
    %v399 = vsub.f32 %v389, %v397
    %v400 = vsub.f32 %v390, %v398
    %v401 = vmul.f32 %v399, %v399
    %v402 = vmul.f32 %v400, %v400
    %v403 = vsel %vm351, %v401, 0.0
    %404 = vadd.xlane.f32.xlu0 %v403
    %v405 = vpop.xlane.xlu0 %404
    %v406 = vsel %vm351, %v402, 0.0
    %407 = vadd.xlane.f32.xlu0 %v406
    %v408 = vpop.xlane.xlu0 %407
    %v409 = vmul.f32 %v405, %v358
    %v410 = vmul.f32 %v408, %v358
    %v411 = vadd.f32 %v409, 1e-12
    %v412 = vadd.f32 %v410, 1e-12
    %v413 = vrsqrt.pop %v411
    %v414 = vrsqrt.pop %v412
    %v415 = vmul.f32 %v399, %v413
    %v416 = vmul.f32 %v400, %v414
    %v417 = vlaneseq
    %v418 = vshrl.u32 %v417, 7
    %v419 = vsub.s32 2, %v418
    %v420 = vrot.slane %v350, %v419
    %v421 = vmul.f32 %v420, %v415
    %v422 = vmul.f32 %v420, %v416
    %v423 = vlaneseq
    %v424 = vshrl.u32 %v423, 7
    %v425 = vsub.s32 3, %v424
    %v426 = vrot.slane %v350, %v425
    %v427 = vadd.f32 %v421, %v426
    %v428 = vadd.f32 %v422, %v426
    %v429 = vld [vmem:[%s5] sm:$0xff]
    %v430 = vld [vmem:[%s5 + $0x8] sm:$0xff]
    %v431 = vld [vmem:[%s5 + $0x10] sm:$0xff]
    %v432 = vld [vmem:[%s5 + $0x18] sm:$0xff]
    %v433 = vld [vmem:[%s6] sm:$0x1]
    %v435 = vlaneseq
    %v436 = vshrl.u32 %v435, 7
    %v437 = vsub.s32 0, %v436
    %v438 = vrot.slane %v433, %v437
    %v441 = vsel %vm351, %v427, 0
    %v444 = vsel %vm351, %v428, 0
    %446 = vmatprep.subr.mxu0 0.0
    %447 = vmatpush1.msra.mxu0 %v429
    %448 = vmatprep.subr.mxu0 0.0
    %449 = vmatpush1.msra.mxu0 %v430
    %450 = vmatprep.subr.mxu0 0.0
    %451 = vmatpush1.msra.mxu0 %v431
    %452 = vmatprep.subr.mxu0 0.0
    %453 = vmatpush1.msra.mxu0 %v432
    %454 = vmatprep.subr.mxu0 0.0
    %455 = vmatpush1.msra.mxu0 0.0
    %456 = vmatprep.subr.mxu0 0.0
    %457 = vmatpush1.msra.mxu0 0.0
    %458 = vmatprep.subr.mxu0 0.0
    %459 = vmatpush1.msra.mxu0 0.0
    %460 = vmatprep.subr.mxu0 0.0
    %461 = vmatpush1.msra.mxu0 0.0
    %462 = vmatprep.subr.mxu0 0.0
    %463 = vmatpush1.msra.mxu0 0.0
    %464 = vmatprep.subr.mxu0 0.0
    %465 = vmatpush1.msra.mxu0 0.0
    %466 = vmatprep.subr.mxu0 0.0
    %467 = vmatpush1.msra.mxu0 0.0
    %468 = vmatprep.subr.mxu0 0.0
    %469 = vmatpush1.msra.mxu0 0.0
    %470 = vmatprep.subr.mxu0 0.0
    %471 = vmatpush1.msra.mxu0 0.0
    %472 = vmatprep.subr.mxu0 0.0
    %473 = vmatpush1.msra.mxu0 0.0
    %474 = vmatprep.subr.mxu0 0.0
    %475 = vmatpush1.msra.mxu0 0.0
    %476 = vmatprep.subr.mxu0 0.0
    %477 = vmatpush1.msra.mxu0 0.0
    %478 = vmatprep.subr.mxu0 0.0
    %479 = vmatpush1.msra.mxu0 0.0
    %480 = vmatprep.subr.mxu0 0.0
    %481 = vmatpush1.msra.mxu0 0.0
    %482 = vmatprep.subr.mxu0 0.0
    %483 = vmatpush1.msra.mxu0 0.0
    %484 = vmatprep.subr.mxu0 0.0
    %485 = vmatpush1.msra.mxu0 0.0
    %486 = vmatprep.subr.mxu0 0.0
    %487 = vmatpush1.msra.mxu0 0.0
    %488 = vmatprep.subr.mxu0 0.0
    %489 = vmatpush1.msra.mxu0 0.0
    %490 = vmatprep.subr.mxu0 0.0
    %491 = vmatpush1.msra.mxu0 0.0
    %492 = vmatprep.subr.mxu0 0.0
    %493 = vmatpush1.msra.mxu0 0.0
    %494 = vmatprep.subr.mxu0 0.0
    %495 = vmatpush1.msra.mxu0 0.0
    %496 = vmatprep.subr.mxu0 0.0
    %497 = vmatpush1.msra.mxu0 0.0
    %498 = vmatprep.subr.mxu0 0.0
    %499 = vmatpush1.msra.mxu0 0.0
    %500 = vmatprep.subr.mxu0 0.0
    %501 = vmatpush1.msra.mxu0 0.0
    %502 = vmatprep.subr.mxu0 0.0
    %503 = vmatpush1.msra.mxu0 0.0
    %504 = vmatprep.subr.mxu0 0.0
    %505 = vmatpush1.msra.mxu0 0.0
    %506 = vmatprep.subr.mxu0 0.0
    %507 = vmatpush1.msra.mxu0 0.0
    %508 = vmatprep.subr.mxu0 0.0
    %509 = vmatpush1.msra.mxu0 0.0
    %510 = vmatprep.mubr.f32.mxu0 0.0
    %511 = vmatmul.mubr.f32.gmra.mrb[0].mxu0 %v441
    %v512 = vpop.f32.mrb[0].mxu0
    %v513 = vadd.f32 %v438, %v512
    %v514 = vpop.f32.mrb[0].mxu0
    %515 = vmatprep.mubr.f32.mxu0 0.0
    %516 = vmatmul.mubr.f32.gmra.mrb[0].mxu0 %v444
    %v517 = vpop.f32.mrb[0].mxu0
    %v518 = vadd.f32 %v438, %v517
    %v519 = vpop.f32.mrb[0].mxu0
    %520 = vdwg.mxu0
    %v521 = vmax.f32 %v513, 0.0
    %v522 = vmax.f32 %v518, 0.0
    %v523 = vld [vmem:[%s7] sm:$0xff]
    %v524 = vld [vmem:[%s7 + $0x8] sm:$0xff]
    %v525 = vld [vmem:[%s7 + $0x10] sm:$0xff]
    %v526 = vld [vmem:[%s7 + $0x18] sm:$0xff]
    %v527 = vld [vmem:[%s7 + $0x20] sm:$0xff]
    %v528 = vld [vmem:[%s7 + $0x28] sm:$0xff]
    %v529 = vld [vmem:[%s7 + $0x30] sm:$0xff]
    %v530 = vld [vmem:[%s7 + $0x38] sm:$0xff]
    %v531 = vlaneseq
    %v532 = vshrl.u32 %v531, 7
    %v533 = vsub.s32 4, %v532
    %v534 = vrot.slane %v350, %v533
    %vm535 = vcmask 523264
    %v537 = vsel %vm535, %v521, 0
    %v540 = vsel %vm535, %v522, 0
    %542 = vmatprep.subr.mxu0 0.0
    %543 = vmatpush1.msra.mxu0 %v523
    %544 = vmatprep.subr.mxu0 0.0
    %545 = vmatpush1.msra.mxu0 %v524
    %546 = vmatprep.subr.mxu0 0.0
    %547 = vmatpush1.msra.mxu0 %v525
    %548 = vmatprep.subr.mxu0 0.0
    %549 = vmatpush1.msra.mxu0 %v526
    %550 = vmatprep.subr.mxu0 0.0
    %551 = vmatpush1.msra.mxu0 %v527
    %552 = vmatprep.subr.mxu0 0.0
    %553 = vmatpush1.msra.mxu0 %v528
    %554 = vmatprep.subr.mxu0 0.0
    %555 = vmatpush1.msra.mxu0 %v529
    %556 = vmatprep.subr.mxu0 0.0
    %557 = vmatpush1.msra.mxu0 %v530
    %558 = vmatprep.subr.mxu0 0.0
    %559 = vmatpush1.msra.mxu0 0.0
    %560 = vmatprep.subr.mxu0 0.0
    %561 = vmatpush1.msra.mxu0 0.0
    %562 = vmatprep.subr.mxu0 0.0
    %563 = vmatpush1.msra.mxu0 0.0
    %564 = vmatprep.subr.mxu0 0.0
    %565 = vmatpush1.msra.mxu0 0.0
    %566 = vmatprep.subr.mxu0 0.0
    %567 = vmatpush1.msra.mxu0 0.0
    %568 = vmatprep.subr.mxu0 0.0
    %569 = vmatpush1.msra.mxu0 0.0
    %570 = vmatprep.subr.mxu0 0.0
    %571 = vmatpush1.msra.mxu0 0.0
    %572 = vmatprep.subr.mxu0 0.0
    %573 = vmatpush1.msra.mxu0 0.0
    %574 = vmatprep.subr.mxu0 0.0
    %575 = vmatpush1.msra.mxu0 0.0
    %576 = vmatprep.subr.mxu0 0.0
    %577 = vmatpush1.msra.mxu0 0.0
    %578 = vmatprep.subr.mxu0 0.0
    %579 = vmatpush1.msra.mxu0 0.0
    %580 = vmatprep.subr.mxu0 0.0
    %581 = vmatpush1.msra.mxu0 0.0
    %582 = vmatprep.subr.mxu0 0.0
    %583 = vmatpush1.msra.mxu0 0.0
    %584 = vmatprep.subr.mxu0 0.0
    %585 = vmatpush1.msra.mxu0 0.0
    %586 = vmatprep.subr.mxu0 0.0
    %587 = vmatpush1.msra.mxu0 0.0
    %588 = vmatprep.subr.mxu0 0.0
    %589 = vmatpush1.msra.mxu0 0.0
    %590 = vmatprep.subr.mxu0 0.0
    %591 = vmatpush1.msra.mxu0 0.0
    %592 = vmatprep.subr.mxu0 0.0
    %593 = vmatpush1.msra.mxu0 0.0
    %594 = vmatprep.subr.mxu0 0.0
    %595 = vmatpush1.msra.mxu0 0.0
    %596 = vmatprep.subr.mxu0 0.0
    %597 = vmatpush1.msra.mxu0 0.0
    %598 = vmatprep.subr.mxu0 0.0
    %599 = vmatpush1.msra.mxu0 0.0
    %600 = vmatprep.subr.mxu0 0.0
    %601 = vmatpush1.msra.mxu0 0.0
    %602 = vmatprep.subr.mxu0 0.0
    %603 = vmatpush1.msra.mxu0 0.0
    %604 = vmatprep.subr.mxu0 0.0
    %605 = vmatpush1.msra.mxu0 0.0
    %606 = vmatprep.mubr.f32.mxu0 0.0
    %607 = vmatmul.mubr.f32.gmra.mrb[0].mxu0 %v537
    %v608 = vpop.f32.mrb[0].mxu0
    %v609 = vadd.f32 %v534, %v608
    %v610 = vpop.f32.mrb[0].mxu0
    %611 = vmatprep.mubr.f32.mxu0 0.0
    %612 = vmatmul.mubr.f32.gmra.mrb[0].mxu0 %v540
    %v613 = vpop.f32.mrb[0].mxu0
    %v614 = vadd.f32 %v534, %v613
    %v615 = vpop.f32.mrb[0].mxu0
    %616 = vdwg.mxu0
    %v617 = vadd.f32 %v609, %v389
    %v618 = vadd.f32 %v614, %v390
    %619 = vst.msk [vmem:[#allocation2] sm:$0xff] %vm351, %v617
    %620 = vst.msk [vmem:[#allocation2 + $0x8] sm:$0xff] %vm351, %v618
    // Predicated region
    $region34: #{tpu_custom_call.1} parent=1 // pred_check
      _
    $region35: #{tpu_custom_call.1} parent=1 // pred_check_branch
      %622 = sbr.rel (0) target = $region37
    $region36: #{tpu_custom_call.1} parent=1 // pred_region
      %s624 = ssub.s32 256, 256
      %625 = vsyncadd [#allocation3], %s624
      %s626 = sshll.u32 [#allocation2], 4
      %s627 = int_to_ptr.vmem [resolvable:$true] %s626
      %632 = dma.vmem_to_hbm [thread:$0]  %s627, 256, %s8, [#allocation3], 128, 128, 8
    $region37: #{tpu_custom_call.1} parent=1 // pred_fallthru
      _
    // Predicated region
    $region38: #{tpu_custom_call.1} parent=1 // pred_check
      _
    $region39: #{tpu_custom_call.1} parent=1 // pred_check_branch
      %634 = sbr.rel (0) target = $region41
    $region40: #{tpu_custom_call.1} parent=1 // pred_region
      %635 = dma.done [#allocation3], 256
    $region41: #{tpu_custom_call.1} parent=1 // pred_fallthru
      _
    %636 = vsyncpa [#allocation3], 1

</llo_original>
